<compile_context>
chip_gen: v5e
topology: v5e:2x2
jax: 0.10.0
libtpu: 0.0.40
codegen_flags: <defaults>
</compile_context>

<pallas_src>
import jax
import jax.numpy as jnp
from jax.experimental import pallas as pl
from jax.experimental.pallas import tpu as pltpu

NUM_FEATURES = 32 * 32 * 3   # 3072
HIDDEN = 100
NUM_CATEGORIES = 10

HIDDEN_P = 128               # lane-padded hidden dim
OUT_P = 128                  # lane-padded output dim
MAX_TILE_B = 256             # 256x3072 f32 block = 3 MiB; 2x buffered fits everywhere


def _mlp_kernel(x_ref, w1_ref, b1_ref, w2_ref, b2_ref, w3_ref, b3_ref, o_ref):
    # x arrives as f32 (read once from HBM); cast to bf16 in-register for the MXU.
    x = x_ref[...].astype(jnp.bfloat16)
    # fc1 + relu (f32 accumulation, f32 bias/relu)
    h1 = jnp.dot(x, w1_ref[...], preferred_element_type=jnp.float32)
    h1 = jnp.maximum(h1 + b1_ref[...], 0.0).astype(jnp.bfloat16)
    # fc2 + relu
    h2 = jnp.dot(h1, w2_ref[...], preferred_element_type=jnp.float32)
    h2 = jnp.maximum(h2 + b2_ref[...], 0.0).astype(jnp.bfloat16)
    # fc3 (no activation); lane-dense [tile_b, 128] store.
    out = jnp.dot(h2, w3_ref[...], preferred_element_type=jnp.float32)
    o_ref[...] = (out + b3_ref[...]).astype(o_ref.dtype)


def _choose_tile_b(b):
    """Batch tile: multiple of 16, <= MAX_TILE_B, and (for b > 16) chosen so
    the grid has >= 2 steps (v7x megacore sharding).  b need not be a multiple
    of the tile: the ragged last block is masked by Pallas."""
    if b <= 16:
        return 16
    half = pl.cdiv(b, 2)
    return min(MAX_TILE_B, pl.cdiv(half, 16) * 16)


def pack_params(params):
    """One-time prep: pad feature dims to 128 lanes and cast weights to bf16.
    Zero padding keeps the math identical (padded hidden units have zero
    pre-activation and contribute zero downstream)."""
    w1, b1, w2, b2, w3, b3 = params
    w1p = jnp.pad(w1, ((0, 0), (0, HIDDEN_P - HIDDEN))).astype(jnp.bfloat16)
    w2p = jnp.pad(w2, ((0, HIDDEN_P - HIDDEN), (0, HIDDEN_P - HIDDEN))).astype(jnp.bfloat16)
    w3p = jnp.pad(w3, ((0, HIDDEN_P - HIDDEN), (0, OUT_P - NUM_CATEGORIES))).astype(jnp.bfloat16)
    b1p = jnp.pad(b1, ((0, 0), (0, HIDDEN_P - HIDDEN)))           # f32
    b2p = jnp.pad(b2, ((0, 0), (0, HIDDEN_P - HIDDEN)))           # f32
    b3p = jnp.pad(b3, ((0, 0), (0, OUT_P - NUM_CATEGORIES)))      # f32
    return (w1p, b1p, w2p, b2p, w3p, b3p)


@jax.jit
def mlp_forward(x, packed_params):
    """x: [B, 3, 32, 32] float32 -> [B, 10] float32."""
    w1p, b1p, w2p, b2p, w3p, b3p = packed_params
    B = x.shape[0]
    x_flat = x.reshape(B, NUM_FEATURES)   # == torch.flatten(x, 1); free reshape

    tile_b = _choose_tile_b(B)
    grid = (pl.cdiv(B, tile_b),)

    def resident(shape):
        # Constant block index -> weights/biases stay resident in VMEM across steps.
        return pl.BlockSpec(shape, lambda i: (0, 0))

    out_pad = pl.pallas_call(
        _mlp_kernel,
        out_shape=jax.ShapeDtypeStruct((B, OUT_P), jnp.bfloat16),
        grid=grid,
        in_specs=[
            pl.BlockSpec((tile_b, NUM_FEATURES), lambda i: (i, 0)),  # streamed f32 x
            resident((NUM_FEATURES, HIDDEN_P)),
            resident((1, HIDDEN_P)),
            resident((HIDDEN_P, HIDDEN_P)),
            resident((1, HIDDEN_P)),
            resident((HIDDEN_P, OUT_P)),
            resident((1, OUT_P)),
        ],
        out_specs=pl.BlockSpec((tile_b, OUT_P), lambda i: (i, 0)),
        compiler_params=pltpu.CompilerParams(
            dimension_semantics=("parallel",),
        ),
    )(x_flat, w1p, b1p, w2p, b2p, w3p, b3p)

    return out_pad[:, :NUM_CATEGORIES].astype(jnp.float32)


def init_params(key):
    """Deterministic init mirroring nn.Linear defaults (uniform +-1/sqrt(fan_in)).
    Weights stored as (in_features, out_features); biases as (1, out_features)."""
    def linear(k, fan_in, fan_out):
        kw, kb = jax.random.split(k)
        bound = 1.0 / jnp.sqrt(fan_in)
        w = jax.random.uniform(kw, (fan_in, fan_out), jnp.float32, -bound, bound)
        b = jax.random.uniform(kb, (1, fan_out), jnp.float32, -bound, bound)
        return w, b

    k1, k2, k3 = jax.random.split(key, 3)
    w1, b1 = linear(k1, NUM_FEATURES, HIDDEN)
    w2, b2 = linear(k2, HIDDEN, HIDDEN)
    w3, b3 = linear(k3, HIDDEN, NUM_CATEGORIES)
    return (w1, b1, w2, b2, w3, b3)


def _reference(x, params):
    """Pure-JAX reference using the same bf16-quantized activations/weights as
    the kernel (accumulation in f32), so the comparison is tight."""
    w1, b1, w2, b2, w3, b3 = params
    q = lambda a: a.astype(jnp.bfloat16).astype(jnp.float32)
    xf = q(x.reshape(x.shape[0], -1))
    h1 = jnp.maximum(xf @ q(w1) + b1, 0.0)
    h2 = jnp.maximum(q(h1) @ q(w2) + b2, 0.0)
    return q(h2) @ q(w3) + b3


# TODO(synk): loss_func (MSELoss) / backward / SGD optimizer step of the
# PyTorch module are training-side ops and are not implemented as Pallas
# kernels here (forward pass only).

if __name__ == "__main__":
    key = jax.random.PRNGKey(0)
    k_params, k_x1, k_x2 = jax.random.split(key, 3)

    params = init_params(k_params)
    packed = pack_params(params)   # one-time weight pack (padded + bf16)

    # Small batch: single, partially-filled grid step (OOB rows masked).
    x_small = jax.random.normal(k_x1, (2, 3, 32, 32), jnp.float32)
    out_small = jax.block_until_ready(mlp_forward(x_small, packed))
    assert out_small.shape == (2, NUM_CATEGORIES)
    ref_small = _reference(x_small, params)
    assert jnp.allclose(out_small, ref_small, atol=2e-2, rtol=2e-2)

    # Larger batch: grid of 2 steps (exercises pipelining + ragged last tile).
    x_big = jax.random.normal(k_x2, (48, 3, 32, 32), jnp.float32)
    out_big = jax.block_until_ready(mlp_forward(x_big, packed))
    assert out_big.shape == (48, NUM_CATEGORIES)
    ref_big = _reference(x_big, params)
    assert jnp.allclose(out_big, ref_big, atol=2e-2, rtol=2e-2)

    print("KERNEL_OK")
</pallas_src>

<mosaic_0001>
module attributes {stable_mosaic.version = 11 : i64} {
  func.func @_mlp_kernel(%arg0: i32, %arg1: memref<16x3072xf32, #tpu.memory_space<vmem>>, %arg2: memref<3072x128xbf16, #tpu.memory_space<vmem>>, %arg3: memref<1x128xf32, #tpu.memory_space<vmem>>, %arg4: memref<128x128xbf16, #tpu.memory_space<vmem>>, %arg5: memref<1x128xf32, #tpu.memory_space<vmem>>, %arg6: memref<128x128xbf16, #tpu.memory_space<vmem>>, %arg7: memref<1x128xf32, #tpu.memory_space<vmem>>, %arg8: memref<16x128xbf16, #tpu.memory_space<vmem>>) attributes {dimension_semantics = [#tpu.dimension_semantics<parallel>], iteration_bounds = array<i64: 1>, scalar_prefetch = 0 : i64, scratch_operands = 0 : i64, tpu.core_type = #tpu.core_type<tc>, window_params = [{transform_indices = @transform_0, window_bounds = array<i64: 16, 3072>}, {pipeline_mode = #tpu.pipeline_mode<synchronous>, transform_indices = @transform_1, window_bounds = array<i64: 3072, 128>}, {pipeline_mode = #tpu.pipeline_mode<synchronous>, transform_indices = @transform_2, window_bounds = array<i64: 1, 128>}, {pipeline_mode = #tpu.pipeline_mode<synchronous>, transform_indices = @transform_3, window_bounds = array<i64: 128, 128>}, {pipeline_mode = #tpu.pipeline_mode<synchronous>, transform_indices = @transform_4, window_bounds = array<i64: 1, 128>}, {pipeline_mode = #tpu.pipeline_mode<synchronous>, transform_indices = @transform_5, window_bounds = array<i64: 128, 128>}, {pipeline_mode = #tpu.pipeline_mode<synchronous>, transform_indices = @transform_6, window_bounds = array<i64: 1, 128>}, {transform_indices = @transform_7, window_bounds = array<i64: 16, 128>}]} {
    %c0 = arith.constant 0 : index
    %c0_0 = arith.constant 0 : index
    %0 = vector.load %arg1[%c0, %c0_0] : memref<16x3072xf32, #tpu.memory_space<vmem>>, vector<16x3072xf32>
    %1 = arith.truncf %0 : vector<16x3072xf32> to vector<16x3072xbf16>
    %c0_1 = arith.constant 0 : index
    %c0_2 = arith.constant 0 : index
    %2 = vector.load %arg2[%c0_1, %c0_2] : memref<3072x128xbf16, #tpu.memory_space<vmem>>, vector<3072x128xbf16>
    %cst = arith.constant dense<0.000000e+00> : vector<16x128xf32>
    %3 = tpu.matmul %1, %2, %cst {dimension_numbers = #tpu.dot_dimension_numbers<[1], [0], [0], [1], [0, 0, 1, 1], [], []>} : vector<16x3072xbf16>, vector<3072x128xbf16>, vector<16x128xf32> -> vector<16x128xf32>
    %c0_3 = arith.constant 0 : index
    %c0_4 = arith.constant 0 : index
    %4 = vector.load %arg3[%c0_3, %c0_4] : memref<1x128xf32, #tpu.memory_space<vmem>>, vector<1x128xf32>
    %5 = vector.broadcast %4 : vector<1x128xf32> to vector<16x128xf32>
    %6 = arith.addf %3, %5 : vector<16x128xf32>
    %cst_5 = arith.constant 0.000000e+00 : f32
    %7 = vector.broadcast %cst_5 : f32 to vector<16x128xf32>
    %8 = arith.maximumf %6, %7 : vector<16x128xf32>
    %9 = arith.truncf %8 : vector<16x128xf32> to vector<16x128xbf16>
    %c0_6 = arith.constant 0 : index
    %c0_7 = arith.constant 0 : index
    %10 = vector.load %arg4[%c0_6, %c0_7] : memref<128x128xbf16, #tpu.memory_space<vmem>>, vector<128x128xbf16>
    %cst_8 = arith.constant dense<0.000000e+00> : vector<16x128xf32>
    %11 = tpu.matmul %9, %10, %cst_8 {dimension_numbers = #tpu.dot_dimension_numbers<[1], [0], [0], [1], [0, 0, 1, 1], [], []>} : vector<16x128xbf16>, vector<128x128xbf16>, vector<16x128xf32> -> vector<16x128xf32>
    %c0_9 = arith.constant 0 : index
    %c0_10 = arith.constant 0 : index
    %12 = vector.load %arg5[%c0_9, %c0_10] : memref<1x128xf32, #tpu.memory_space<vmem>>, vector<1x128xf32>
    %13 = vector.broadcast %12 : vector<1x128xf32> to vector<16x128xf32>
    %14 = arith.addf %11, %13 : vector<16x128xf32>
    %cst_11 = arith.constant 0.000000e+00 : f32
    %15 = vector.broadcast %cst_11 : f32 to vector<16x128xf32>
    %16 = arith.maximumf %14, %15 : vector<16x128xf32>
    %17 = arith.truncf %16 : vector<16x128xf32> to vector<16x128xbf16>
    %c0_12 = arith.constant 0 : index
    %c0_13 = arith.constant 0 : index
    %18 = vector.load %arg6[%c0_12, %c0_13] : memref<128x128xbf16, #tpu.memory_space<vmem>>, vector<128x128xbf16>
    %cst_14 = arith.constant dense<0.000000e+00> : vector<16x128xf32>
    %19 = tpu.matmul %17, %18, %cst_14 {dimension_numbers = #tpu.dot_dimension_numbers<[1], [0], [0], [1], [0, 0, 1, 1], [], []>} : vector<16x128xbf16>, vector<128x128xbf16>, vector<16x128xf32> -> vector<16x128xf32>
    %c0_15 = arith.constant 0 : index
    %c0_16 = arith.constant 0 : index
    %20 = vector.load %arg7[%c0_15, %c0_16] : memref<1x128xf32, #tpu.memory_space<vmem>>, vector<1x128xf32>
    %21 = vector.broadcast %20 : vector<1x128xf32> to vector<16x128xf32>
    %22 = arith.addf %19, %21 : vector<16x128xf32>
    %23 = arith.truncf %22 : vector<16x128xf32> to vector<16x128xbf16>
    %c0_17 = arith.constant 0 : index
    %c0_18 = arith.constant 0 : index
    %24 = vector.load %arg8[%c0_17, %c0_18] : memref<16x128xbf16, #tpu.memory_space<vmem>>, vector<16x128xbf16>
    tpu.vector_store %arg8[%c0_17, %c0_18], %23 {strides = array<i32>} : memref<16x128xbf16, #tpu.memory_space<vmem>>, vector<16x128xbf16>,
    return
  }
  func.func @transform_0(%arg0: i32) -> (i32, i32) {
    %c0_i32 = arith.constant 0 : i32
    %c0_i32_0 = arith.constant 0 : i32
    return %arg0, %c0_i32 : i32, i32
  }
  func.func @transform_1(%arg0: i32) -> (i32, i32) {
    %c0_i32 = arith.constant 0 : i32
    %c0_i32_0 = arith.constant 0 : i32
    %c0_i32_1 = arith.constant 0 : i32
    return %c0_i32, %c0_i32_0 : i32, i32
  }
  func.func @transform_2(%arg0: i32) -> (i32, i32) {
    %c0_i32 = arith.constant 0 : i32
    %c0_i32_0 = arith.constant 0 : i32
    %c0_i32_1 = arith.constant 0 : i32
    return %c0_i32, %c0_i32_0 : i32, i32
  }
  func.func @transform_3(%arg0: i32) -> (i32, i32) {
    %c0_i32 = arith.constant 0 : i32
    %c0_i32_0 = arith.constant 0 : i32
    %c0_i32_1 = arith.constant 0 : i32
    return %c0_i32, %c0_i32_0 : i32, i32
  }
  func.func @transform_4(%arg0: i32) -> (i32, i32) {
    %c0_i32 = arith.constant 0 : i32
    %c0_i32_0 = arith.constant 0 : i32
    %c0_i32_1 = arith.constant 0 : i32
    return %c0_i32, %c0_i32_0 : i32, i32
  }
  func.func @transform_5(%arg0: i32) -> (i32, i32) {
    %c0_i32 = arith.constant 0 : i32
    %c0_i32_0 = arith.constant 0 : i32
    %c0_i32_1 = arith.constant 0 : i32
    return %c0_i32, %c0_i32_0 : i32, i32
  }
  func.func @transform_6(%arg0: i32) -> (i32, i32) {
    %c0_i32 = arith.constant 0 : i32
    %c0_i32_0 = arith.constant 0 : i32
    %c0_i32_1 = arith.constant 0 : i32
    return %c0_i32, %c0_i32_0 : i32, i32
  }
  func.func @transform_7(%arg0: i32) -> (i32, i32) {
    %c0_i32 = arith.constant 0 : i32
    %c0_i32_0 = arith.constant 0 : i32
    return %arg0, %c0_i32 : i32, i32
  }
}

</mosaic_0001>

<llo_original>
// kernel: mlp_forward.1
$region0: #{mlp_forward.1}
  #allocation0 [shape = 'u32[]', space=smem, size = 0x4, offset = 0x4, fixed_abs, tag = 'smem constant byte address 0x4 - core index']
  #allocation1 [shape = 'u32[72,128]{1,0:T(1,128)}', space=vmem, size = 0x9000, scoped, tag = 'internal scratch']
  %s0 = inlined_call_operand.vmem [shape: f32[2,3072], index: 0, kind: input, shape index: {}]
  %s1 = inlined_call_operand.hbm [shape: bf16[3072,128], index: 1, kind: input, shape index: {}]
  %s2 = inlined_call_operand.vmem [shape: f32[1,128], index: 2, kind: input, shape index: {}]
  %s3 = inlined_call_operand.vmem [shape: bf16[128,128], index: 3, kind: input, shape index: {}]
  %s4 = inlined_call_operand.vmem [shape: f32[1,128], index: 4, kind: input, shape index: {}]
  %s5 = inlined_call_operand.vmem [shape: bf16[128,128], index: 5, kind: input, shape index: {}]
  %s6 = inlined_call_operand.vmem [shape: f32[1,128], index: 6, kind: input, shape index: {}]
  %s7 = inlined_call_operand.vmem [shape: bf16[2,128], index: 7, kind: output, shape index: {}]
  %s8 = sld [smem:[#allocation0]]
  $region72: #{mlp_forward.1} parent=0
    _
  %s10 = ssub.s32 1, %s8
  %s11 = scalar_select 0, %s10, %s8
  $region1: #{mlp_forward.1} parent=0
    #allocation2 [shape = 'u8[786432]{0}', space=vmem, size = 0xc0000, scoped, tag = 'input window, operand 1, single buffered']
    #allocation3 [shape = 's32[1]{0}', space=sflag, size = 0x4, scoped, tag = 'scoped memory for mlp_forward.1']
    #allocation4 [shape = 'u8[4096]{0}', space=vmem, size = 0x1000, scoped, tag = 'output window, operand 0, single buffered']
    %12 = vsyncpa [#allocation3], 0
    // Predicated region
    $region2: #{mlp_forward.1} parent=1 // pred_check
      _
    $region3: #{mlp_forward.1} parent=1 // pred_check_branch
      %14 = sbr.rel (0) target = $region5
    $region4: #{mlp_forward.1} parent=1 // pred_region
      _
    $region5: #{mlp_forward.1} parent=1 // pred_fallthru
      _
    // Predicated region
    $region6: #{mlp_forward.1} parent=1 // pred_check
      _
    $region7: #{mlp_forward.1} parent=1 // pred_check_branch
      %16 = sbr.rel (0) target = $region9
    $region8: #{mlp_forward.1} parent=1 // pred_region
      %18 = vsyncadd [#allocation3], 0
      %s19 = sshll.u32 %s1, 4
      %s20 = int_to_ptr.hbm [resolvable:$true] %s19
      %s21 = sshll.u32 [#allocation2], 4
      %s22 = int_to_ptr.vmem [resolvable:$true] %s21
      %27 = dma.hbm_to_vmem [thread:$0]  %s20, 24576, %s22, [#allocation3], 64, 64, 4
    $region9: #{mlp_forward.1} parent=1 // pred_fallthru
      _
    // Predicated region
    $region10: #{mlp_forward.1} parent=1 // pred_check
      _
    $region11: #{mlp_forward.1} parent=1 // pred_check_branch
      %29 = sbr.rel (0) target = $region13
    $region12: #{mlp_forward.1} parent=1 // pred_region
      _
    $region13: #{mlp_forward.1} parent=1 // pred_fallthru
      _
    // Predicated region
    $region14: #{mlp_forward.1} parent=1 // pred_check
      _
    $region15: #{mlp_forward.1} parent=1 // pred_check_branch
      %31 = sbr.rel (0) target = $region17
    $region16: #{mlp_forward.1} parent=1 // pred_region
      _
    $region17: #{mlp_forward.1} parent=1 // pred_fallthru
      _
    // Predicated region
    $region18: #{mlp_forward.1} parent=1 // pred_check
      _
    $region19: #{mlp_forward.1} parent=1 // pred_check_branch
      %33 = sbr.rel (0) target = $region21
    $region20: #{mlp_forward.1} parent=1 // pred_region
      _
    $region21: #{mlp_forward.1} parent=1 // pred_fallthru
      _
    // Predicated region
    $region22: #{mlp_forward.1} parent=1 // pred_check
      _
    $region23: #{mlp_forward.1} parent=1 // pred_check_branch
      %35 = sbr.rel (0) target = $region25
    $region24: #{mlp_forward.1} parent=1 // pred_region
      _
    $region25: #{mlp_forward.1} parent=1 // pred_fallthru
      _
    // Predicated region
    $region26: #{mlp_forward.1} parent=1 // pred_check
      _
    $region27: #{mlp_forward.1} parent=1 // pred_check_branch
      %37 = sbr.rel (0) target = $region29
    $region28: #{mlp_forward.1} parent=1 // pred_region
      _
    $region29: #{mlp_forward.1} parent=1 // pred_fallthru
      _
    // Predicated region
    $region30: #{mlp_forward.1} parent=1 // pred_check
      _
    $region31: #{mlp_forward.1} parent=1 // pred_check_branch
      %39 = sbr.rel (0) target = $region33
    $region32: #{mlp_forward.1} parent=1 // pred_region
      %41 = dma.done [#allocation3], 24576
    $region33: #{mlp_forward.1} parent=1 // pred_fallthru
      _
    %v42 = vld [vmem:[%s0] sm:$0xff]
    %v43 = vld [vmem:[%s0 + $0x8] sm:$0xff]
    %v44 = vld [vmem:[%s0 + $0x10] sm:$0xff]
    %v45 = vld [vmem:[%s0 + $0x18] sm:$0xff]
    %v46 = vld [vmem:[%s0 + $0x20] sm:$0xff]
    %v47 = vld [vmem:[%s0 + $0x28] sm:$0xff]
    %v48 = vld [vmem:[%s0 + $0x30] sm:$0xff]
    %v49 = vld [vmem:[%s0 + $0x38] sm:$0xff]
    %v50 = vld [vmem:[%s0 + $0x40] sm:$0xff]
    %v51 = vld [vmem:[%s0 + $0x48] sm:$0xff]
    %v52 = vld [vmem:[%s0 + $0x50] sm:$0xff]
    %v53 = vld [vmem:[%s0 + $0x58] sm:$0xff]
    %v54 = vld [vmem:[%s0 + $0x60] sm:$0xff]
    %v55 = vld [vmem:[%s0 + $0x68] sm:$0xff]
    %v56 = vld [vmem:[%s0 + $0x70] sm:$0xff]
    %v57 = vld [vmem:[%s0 + $0x78] sm:$0xff]
    %v58 = vld [vmem:[%s0 + $0x80] sm:$0xff]
    %v59 = vld [vmem:[%s0 + $0x88] sm:$0xff]
    %v60 = vld [vmem:[%s0 + $0x90] sm:$0xff]
    %v61 = vld [vmem:[%s0 + $0x98] sm:$0xff]
    %v62 = vld [vmem:[%s0 + $0xa0] sm:$0xff]
    %v63 = vld [vmem:[%s0 + $0xa8] sm:$0xff]
    %v64 = vld [vmem:[%s0 + $0xb0] sm:$0xff]
    %v65 = vld [vmem:[%s0 + $0xb8] sm:$0xff]
    %v66 = vld [vmem:[%s0 + $0xc0] sm:$0xff]
    %v67 = vld [vmem:[%s0 + $0xc8] sm:$0xff]
    %v68 = vld [vmem:[%s0 + $0xd0] sm:$0xff]
    %v69 = vld [vmem:[%s0 + $0xd8] sm:$0xff]
    %v70 = vld [vmem:[%s0 + $0xe0] sm:$0xff]
    %v71 = vld [vmem:[%s0 + $0xe8] sm:$0xff]
    %v72 = vld [vmem:[%s0 + $0xf0] sm:$0xff]
    %v73 = vld [vmem:[%s0 + $0xf8] sm:$0xff]
    %v74 = vld [vmem:[%s0 + $0x100] sm:$0xff]
    %v75 = vld [vmem:[%s0 + $0x108] sm:$0xff]
    %v76 = vld [vmem:[%s0 + $0x110] sm:$0xff]
    %v77 = vld [vmem:[%s0 + $0x118] sm:$0xff]
    %v78 = vld [vmem:[%s0 + $0x120] sm:$0xff]
    %v79 = vld [vmem:[%s0 + $0x128] sm:$0xff]
    %v80 = vld [vmem:[%s0 + $0x130] sm:$0xff]
    %v81 = vld [vmem:[%s0 + $0x138] sm:$0xff]
    %v82 = vld [vmem:[%s0 + $0x140] sm:$0xff]
    %v83 = vld [vmem:[%s0 + $0x148] sm:$0xff]
    %v84 = vld [vmem:[%s0 + $0x150] sm:$0xff]
    %v85 = vld [vmem:[%s0 + $0x158] sm:$0xff]
    %v86 = vld [vmem:[%s0 + $0x160] sm:$0xff]
    %v87 = vld [vmem:[%s0 + $0x168] sm:$0xff]
    %v88 = vld [vmem:[%s0 + $0x170] sm:$0xff]
    %v89 = vld [vmem:[%s0 + $0x178] sm:$0xff]
    %138 = vst [vmem:[#allocation1] ss:$4 sm:$0xff] %v42
    %s139 = scalar_lea.vmem [#allocation1], 1
    %140 = vst [vmem:[%s139] ss:$4 sm:$0xff] %v48
    %s141 = scalar_lea.vmem [#allocation1], 2
    %142 = vst [vmem:[%s141] ss:$4 sm:$0xff] %v54
    %s143 = scalar_lea.vmem [#allocation1], 3
    %144 = vst [vmem:[%s143] ss:$4 sm:$0xff] %v60
    %s145 = scalar_lea.vmem [#allocation1], 32
    %146 = vst [vmem:[%s145] ss:$4 sm:$0xff] %v43
    %s147 = scalar_lea.vmem [#allocation1], 33
    %148 = vst [vmem:[%s147] ss:$4 sm:$0xff] %v49
    %s149 = scalar_lea.vmem [#allocation1], 34
    %150 = vst [vmem:[%s149] ss:$4 sm:$0xff] %v55
    %s151 = scalar_lea.vmem [#allocation1], 35
    %152 = vst [vmem:[%s151] ss:$4 sm:$0xff] %v61
    %v153 = vld.sshfl [vmem:[#allocation1] sm:$0xff pattern:$0x73625140]
    %v154 = vld.sshfl [vmem:[#allocation1 + $0x8] sm:$0xff pattern:$0x73625140]
    %v155 = vld.sshfl [vmem:[#allocation1 + $0x10] sm:$0xff pattern:$0x73625140]
    %v156 = vld.sshfl [vmem:[#allocation1 + $0x18] sm:$0xff pattern:$0x73625140]
    %v157 = vld.sshfl [vmem:[#allocation1 + $0x20] sm:$0xff pattern:$0x73625140]
    %v158 = vld.sshfl [vmem:[#allocation1 + $0x28] sm:$0xff pattern:$0x73625140]
    %v159 = vld.sshfl [vmem:[#allocation1 + $0x30] sm:$0xff pattern:$0x73625140]
    %v160 = vld.sshfl [vmem:[#allocation1 + $0x38] sm:$0xff pattern:$0x73625140]
    %161 = vst [vmem:[#allocation1] ss:$4 sm:$0xff] %v44
    %162 = vst [vmem:[%s139] ss:$4 sm:$0xff] %v50
    %163 = vst [vmem:[%s141] ss:$4 sm:$0xff] %v56
    %164 = vst [vmem:[%s143] ss:$4 sm:$0xff] %v62
    %165 = vst [vmem:[%s145] ss:$4 sm:$0xff] %v45
    %166 = vst [vmem:[%s147] ss:$4 sm:$0xff] %v51
    %167 = vst [vmem:[%s149] ss:$4 sm:$0xff] %v57
    %168 = vst [vmem:[%s151] ss:$4 sm:$0xff] %v63
    %v169 = vld.sshfl [vmem:[#allocation1] sm:$0xff pattern:$0x73625140]
    %v170 = vld.sshfl [vmem:[#allocation1 + $0x8] sm:$0xff pattern:$0x73625140]
    %v171 = vld.sshfl [vmem:[#allocation1 + $0x10] sm:$0xff pattern:$0x73625140]
    %v172 = vld.sshfl [vmem:[#allocation1 + $0x18] sm:$0xff pattern:$0x73625140]
    %v173 = vld.sshfl [vmem:[#allocation1 + $0x20] sm:$0xff pattern:$0x73625140]
    %v174 = vld.sshfl [vmem:[#allocation1 + $0x28] sm:$0xff pattern:$0x73625140]
    %v175 = vld.sshfl [vmem:[#allocation1 + $0x30] sm:$0xff pattern:$0x73625140]
    %v176 = vld.sshfl [vmem:[#allocation1 + $0x38] sm:$0xff pattern:$0x73625140]
    %177 = vst [vmem:[#allocation1] ss:$4 sm:$0xff] %v46
    %178 = vst [vmem:[%s139] ss:$4 sm:$0xff] %v52
    %179 = vst [vmem:[%s141] ss:$4 sm:$0xff] %v58
    %180 = vst [vmem:[%s143] ss:$4 sm:$0xff] %v64
    %181 = vst [vmem:[%s145] ss:$4 sm:$0xff] %v47
    %182 = vst [vmem:[%s147] ss:$4 sm:$0xff] %v53
    %183 = vst [vmem:[%s149] ss:$4 sm:$0xff] %v59
    %184 = vst [vmem:[%s151] ss:$4 sm:$0xff] %v65
    %v185 = vld.sshfl [vmem:[#allocation1] sm:$0xff pattern:$0x73625140]
    %v186 = vld.sshfl [vmem:[#allocation1 + $0x8] sm:$0xff pattern:$0x73625140]
    %v187 = vld.sshfl [vmem:[#allocation1 + $0x10] sm:$0xff pattern:$0x73625140]
    %v188 = vld.sshfl [vmem:[#allocation1 + $0x18] sm:$0xff pattern:$0x73625140]
    %v189 = vld.sshfl [vmem:[#allocation1 + $0x20] sm:$0xff pattern:$0x73625140]
    %v190 = vld.sshfl [vmem:[#allocation1 + $0x28] sm:$0xff pattern:$0x73625140]
    %v191 = vld.sshfl [vmem:[#allocation1 + $0x30] sm:$0xff pattern:$0x73625140]
    %v192 = vld.sshfl [vmem:[#allocation1 + $0x38] sm:$0xff pattern:$0x73625140]
    %193 = vst [vmem:[#allocation1] ss:$4 sm:$0xff] %v66
    %194 = vst [vmem:[%s139] ss:$4 sm:$0xff] %v72
    %195 = vst [vmem:[%s141] ss:$4 sm:$0xff] %v78
    %196 = vst [vmem:[%s143] ss:$4 sm:$0xff] %v84
    %197 = vst [vmem:[%s145] ss:$4 sm:$0xff] %v67
    %198 = vst [vmem:[%s147] ss:$4 sm:$0xff] %v73
    %199 = vst [vmem:[%s149] ss:$4 sm:$0xff] %v79
    %200 = vst [vmem:[%s151] ss:$4 sm:$0xff] %v85
    %v201 = vld.sshfl [vmem:[#allocation1] sm:$0xff pattern:$0x73625140]
    %v202 = vld.sshfl [vmem:[#allocation1 + $0x8] sm:$0xff pattern:$0x73625140]
    %v203 = vld.sshfl [vmem:[#allocation1 + $0x10] sm:$0xff pattern:$0x73625140]
    %v204 = vld.sshfl [vmem:[#allocation1 + $0x18] sm:$0xff pattern:$0x73625140]
    %v205 = vld.sshfl [vmem:[#allocation1 + $0x20] sm:$0xff pattern:$0x73625140]
    %v206 = vld.sshfl [vmem:[#allocation1 + $0x28] sm:$0xff pattern:$0x73625140]
    %v207 = vld.sshfl [vmem:[#allocation1 + $0x30] sm:$0xff pattern:$0x73625140]
    %v208 = vld.sshfl [vmem:[#allocation1 + $0x38] sm:$0xff pattern:$0x73625140]
    %209 = vst [vmem:[#allocation1] ss:$4 sm:$0xff] %v68
    %210 = vst [vmem:[%s139] ss:$4 sm:$0xff] %v74
    %211 = vst [vmem:[%s141] ss:$4 sm:$0xff] %v80
    %212 = vst [vmem:[%s143] ss:$4 sm:$0xff] %v86
    %213 = vst [vmem:[%s145] ss:$4 sm:$0xff] %v69
    %214 = vst [vmem:[%s147] ss:$4 sm:$0xff] %v75
    %215 = vst [vmem:[%s149] ss:$4 sm:$0xff] %v81
    %216 = vst [vmem:[%s151] ss:$4 sm:$0xff] %v87
    %v217 = vld.sshfl [vmem:[#allocation1] sm:$0xff pattern:$0x73625140]
    %v218 = vld.sshfl [vmem:[#allocation1 + $0x8] sm:$0xff pattern:$0x73625140]
    %v219 = vld.sshfl [vmem:[#allocation1 + $0x10] sm:$0xff pattern:$0x73625140]
    %v220 = vld.sshfl [vmem:[#allocation1 + $0x18] sm:$0xff pattern:$0x73625140]
    %v221 = vld.sshfl [vmem:[#allocation1 + $0x20] sm:$0xff pattern:$0x73625140]
    %v222 = vld.sshfl [vmem:[#allocation1 + $0x28] sm:$0xff pattern:$0x73625140]
    %v223 = vld.sshfl [vmem:[#allocation1 + $0x30] sm:$0xff pattern:$0x73625140]
    %v224 = vld.sshfl [vmem:[#allocation1 + $0x38] sm:$0xff pattern:$0x73625140]
    %225 = vst [vmem:[#allocation1] ss:$4 sm:$0xff] %v70
    %226 = vst [vmem:[%s139] ss:$4 sm:$0xff] %v76
    %227 = vst [vmem:[%s141] ss:$4 sm:$0xff] %v82
    %228 = vst [vmem:[%s143] ss:$4 sm:$0xff] %v88
    %229 = vst [vmem:[%s145] ss:$4 sm:$0xff] %v71
    %230 = vst [vmem:[%s147] ss:$4 sm:$0xff] %v77
    %231 = vst [vmem:[%s149] ss:$4 sm:$0xff] %v83
    %232 = vst [vmem:[%s151] ss:$4 sm:$0xff] %v89
    %v233 = vld.sshfl [vmem:[#allocation1] sm:$0xff pattern:$0x73625140]
    %v234 = vld.sshfl [vmem:[#allocation1 + $0x8] sm:$0xff pattern:$0x73625140]
    %v235 = vld.sshfl [vmem:[#allocation1 + $0x10] sm:$0xff pattern:$0x73625140]
    %v236 = vld.sshfl [vmem:[#allocation1 + $0x18] sm:$0xff pattern:$0x73625140]
    %v237 = vld.sshfl [vmem:[#allocation1 + $0x20] sm:$0xff pattern:$0x73625140]
    %v238 = vld.sshfl [vmem:[#allocation1 + $0x28] sm:$0xff pattern:$0x73625140]
    %v239 = vld.sshfl [vmem:[#allocation1 + $0x30] sm:$0xff pattern:$0x73625140]
    %v240 = vld.sshfl [vmem:[#allocation1 + $0x38] sm:$0xff pattern:$0x73625140]
    %v289 = vpack.c.bf16 %v201, %v153
    %v290 = vpack.c.bf16 %v202, %v154
    %v291 = vpack.c.bf16 %v203, %v155
    %v292 = vpack.c.bf16 %v204, %v156
    %v293 = vpack.c.bf16 %v205, %v157
    %v294 = vpack.c.bf16 %v206, %v158
    %v295 = vpack.c.bf16 %v207, %v159
    %v296 = vpack.c.bf16 %v208, %v160
    %v297 = vpack.c.bf16 %v217, %v169
    %v298 = vpack.c.bf16 %v218, %v170
    %v299 = vpack.c.bf16 %v219, %v171
    %v300 = vpack.c.bf16 %v220, %v172
    %v301 = vpack.c.bf16 %v221, %v173
    %v302 = vpack.c.bf16 %v222, %v174
    %v303 = vpack.c.bf16 %v223, %v175
    %v304 = vpack.c.bf16 %v224, %v176
    %v305 = vpack.c.bf16 %v233, %v185
    %v306 = vpack.c.bf16 %v234, %v186
    %v307 = vpack.c.bf16 %v235, %v187
    %v308 = vpack.c.bf16 %v236, %v188
    %v309 = vpack.c.bf16 %v237, %v189
    %v310 = vpack.c.bf16 %v238, %v190
    %v311 = vpack.c.bf16 %v239, %v191
    %v312 = vpack.c.bf16 %v240, %v192
    %v313 = vld [vmem:[#allocation2] sm:$0xf]
    %v314 = vld [vmem:[#allocation2 + $0x4] sm:$0xf]
    %v315 = vld [vmem:[#allocation2 + $0x8] sm:$0xf]
    %v316 = vld [vmem:[#allocation2 + $0xc] sm:$0xf]
    %v317 = vld [vmem:[#allocation2 + $0x10] sm:$0xf]
    %v318 = vld [vmem:[#allocation2 + $0x14] sm:$0xf]
    %v319 = vld [vmem:[#allocation2 + $0x18] sm:$0xf]
    %v320 = vld [vmem:[#allocation2 + $0x1c] sm:$0xf]
    %v321 = vld [vmem:[#allocation2 + $0x20] sm:$0xf]
    %v322 = vld [vmem:[#allocation2 + $0x24] sm:$0xf]
    %v323 = vld [vmem:[#allocation2 + $0x28] sm:$0xf]
    %v324 = vld [vmem:[#allocation2 + $0x2c] sm:$0xf]
    %v325 = vld [vmem:[#allocation2 + $0x30] sm:$0xf]
    %v326 = vld [vmem:[#allocation2 + $0x34] sm:$0xf]
    %v327 = vld [vmem:[#allocation2 + $0x38] sm:$0xf]
    %v328 = vld [vmem:[#allocation2 + $0x3c] sm:$0xf]
    %v329 = vld [vmem:[#allocation2 + $0x40] sm:$0xf]
    %v330 = vld [vmem:[#allocation2 + $0x44] sm:$0xf]
    %v331 = vld [vmem:[#allocation2 + $0x48] sm:$0xf]
    %v332 = vld [vmem:[#allocation2 + $0x4c] sm:$0xf]
    %v333 = vld [vmem:[#allocation2 + $0x50] sm:$0xf]
    %v334 = vld [vmem:[#allocation2 + $0x54] sm:$0xf]
    %v335 = vld [vmem:[#allocation2 + $0x58] sm:$0xf]
    %v336 = vld [vmem:[#allocation2 + $0x5c] sm:$0xf]
    %v337 = vld [vmem:[#allocation2 + $0x60] sm:$0xf]
    %v338 = vld [vmem:[#allocation2 + $0x64] sm:$0xf]
    %v339 = vld [vmem:[#allocation2 + $0x68] sm:$0xf]
    %v340 = vld [vmem:[#allocation2 + $0x6c] sm:$0xf]
    %v341 = vld [vmem:[#allocation2 + $0x70] sm:$0xf]
    %v342 = vld [vmem:[#allocation2 + $0x74] sm:$0xf]
    %v343 = vld [vmem:[#allocation2 + $0x78] sm:$0xf]
    %v344 = vld [vmem:[#allocation2 + $0x7c] sm:$0xf]
    %v345 = vld [vmem:[#allocation2 + $0x80] sm:$0xf]
    %v346 = vld [vmem:[#allocation2 + $0x84] sm:$0xf]
    %v347 = vld [vmem:[#allocation2 + $0x88] sm:$0xf]
    %v348 = vld [vmem:[#allocation2 + $0x8c] sm:$0xf]
    %v349 = vld [vmem:[#allocation2 + $0x90] sm:$0xf]
    %v350 = vld [vmem:[#allocation2 + $0x94] sm:$0xf]
    %v351 = vld [vmem:[#allocation2 + $0x98] sm:$0xf]
    %v352 = vld [vmem:[#allocation2 + $0x9c] sm:$0xf]
    %v353 = vld [vmem:[#allocation2 + $0xa0] sm:$0xf]
    %v354 = vld [vmem:[#allocation2 + $0xa4] sm:$0xf]
    %v355 = vld [vmem:[#allocation2 + $0xa8] sm:$0xf]
    %v356 = vld [vmem:[#allocation2 + $0xac] sm:$0xf]
    %v357 = vld [vmem:[#allocation2 + $0xb0] sm:$0xf]
    %v358 = vld [vmem:[#allocation2 + $0xb4] sm:$0xf]
    %v359 = vld [vmem:[#allocation2 + $0xb8] sm:$0xf]
    %v360 = vld [vmem:[#allocation2 + $0xbc] sm:$0xf]
    %v361 = vld [vmem:[#allocation2 + $0xc0] sm:$0xf]
    %v362 = vld [vmem:[#allocation2 + $0xc4] sm:$0xf]
    %v363 = vld [vmem:[#allocation2 + $0xc8] sm:$0xf]
    %v364 = vld [vmem:[#allocation2 + $0xcc] sm:$0xf]
    %v365 = vld [vmem:[#allocation2 + $0xd0] sm:$0xf]
    %v366 = vld [vmem:[#allocation2 + $0xd4] sm:$0xf]
    %v367 = vld [vmem:[#allocation2 + $0xd8] sm:$0xf]
    %v368 = vld [vmem:[#allocation2 + $0xdc] sm:$0xf]
    %v369 = vld [vmem:[#allocation2 + $0xe0] sm:$0xf]
    %v370 = vld [vmem:[#allocation2 + $0xe4] sm:$0xf]
    %v371 = vld [vmem:[#allocation2 + $0xe8] sm:$0xf]
    %v372 = vld [vmem:[#allocation2 + $0xec] sm:$0xf]
    %v373 = vld [vmem:[#allocation2 + $0xf0] sm:$0xf]
    %v374 = vld [vmem:[#allocation2 + $0xf4] sm:$0xf]
    %v375 = vld [vmem:[#allocation2 + $0xf8] sm:$0xf]
    %v376 = vld [vmem:[#allocation2 + $0xfc] sm:$0xf]
    %v377 = vld [vmem:[#allocation2 + $0x100] sm:$0xf]
    %v378 = vld [vmem:[#allocation2 + $0x104] sm:$0xf]
    %v379 = vld [vmem:[#allocation2 + $0x108] sm:$0xf]
    %v380 = vld [vmem:[#allocation2 + $0x10c] sm:$0xf]
    %v381 = vld [vmem:[#allocation2 + $0x110] sm:$0xf]
    %v382 = vld [vmem:[#allocation2 + $0x114] sm:$0xf]
    %v383 = vld [vmem:[#allocation2 + $0x118] sm:$0xf]
    %v384 = vld [vmem:[#allocation2 + $0x11c] sm:$0xf]
    %v385 = vld [vmem:[#allocation2 + $0x120] sm:$0xf]
    %v386 = vld [vmem:[#allocation2 + $0x124] sm:$0xf]
    %v387 = vld [vmem:[#allocation2 + $0x128] sm:$0xf]
    %v388 = vld [vmem:[#allocation2 + $0x12c] sm:$0xf]
    %v389 = vld [vmem:[#allocation2 + $0x130] sm:$0xf]
    %v390 = vld [vmem:[#allocation2 + $0x134] sm:$0xf]
    %v391 = vld [vmem:[#allocation2 + $0x138] sm:$0xf]
    %v392 = vld [vmem:[#allocation2 + $0x13c] sm:$0xf]
    %v393 = vld [vmem:[#allocation2 + $0x140] sm:$0xf]
    %v394 = vld [vmem:[#allocation2 + $0x144] sm:$0xf]
    %v395 = vld [vmem:[#allocation2 + $0x148] sm:$0xf]
    %v396 = vld [vmem:[#allocation2 + $0x14c] sm:$0xf]
    %v397 = vld [vmem:[#allocation2 + $0x150] sm:$0xf]
    %v398 = vld [vmem:[#allocation2 + $0x154] sm:$0xf]
    %v399 = vld [vmem:[#allocation2 + $0x158] sm:$0xf]
    %v400 = vld [vmem:[#allocation2 + $0x15c] sm:$0xf]
    %v401 = vld [vmem:[#allocation2 + $0x160] sm:$0xf]
    %v402 = vld [vmem:[#allocation2 + $0x164] sm:$0xf]
    %v403 = vld [vmem:[#allocation2 + $0x168] sm:$0xf]
    %v404 = vld [vmem:[#allocation2 + $0x16c] sm:$0xf]
    %v405 = vld [vmem:[#allocation2 + $0x170] sm:$0xf]
    %v406 = vld [vmem:[#allocation2 + $0x174] sm:$0xf]
    %v407 = vld [vmem:[#allocation2 + $0x178] sm:$0xf]
    %v408 = vld [vmem:[#allocation2 + $0x17c] sm:$0xf]
    %v409 = vld [vmem:[#allocation2 + $0x180] sm:$0xf]
    %v410 = vld [vmem:[#allocation2 + $0x184] sm:$0xf]
    %v411 = vld [vmem:[#allocation2 + $0x188] sm:$0xf]
    %v412 = vld [vmem:[#allocation2 + $0x18c] sm:$0xf]
    %v413 = vld [vmem:[#allocation2 + $0x190] sm:$0xf]
    %v414 = vld [vmem:[#allocation2 + $0x194] sm:$0xf]
    %v415 = vld [vmem:[#allocation2 + $0x198] sm:$0xf]
    %v416 = vld [vmem:[#allocation2 + $0x19c] sm:$0xf]
    %v417 = vld [vmem:[#allocation2 + $0x1a0] sm:$0xf]
    %v418 = vld [vmem:[#allocation2 + $0x1a4] sm:$0xf]
    %v419 = vld [vmem:[#allocation2 + $0x1a8] sm:$0xf]
    %v420 = vld [vmem:[#allocation2 + $0x1ac] sm:$0xf]
    %v421 = vld [vmem:[#allocation2 + $0x1b0] sm:$0xf]
    %v422 = vld [vmem:[#allocation2 + $0x1b4] sm:$0xf]
    %v423 = vld [vmem:[#allocation2 + $0x1b8] sm:$0xf]
    %v424 = vld [vmem:[#allocation2 + $0x1bc] sm:$0xf]
    %v425 = vld [vmem:[#allocation2 + $0x1c0] sm:$0xf]
    %v426 = vld [vmem:[#allocation2 + $0x1c4] sm:$0xf]
    %v427 = vld [vmem:[#allocation2 + $0x1c8] sm:$0xf]
    %v428 = vld [vmem:[#allocation2 + $0x1cc] sm:$0xf]
    %v429 = vld [vmem:[#allocation2 + $0x1d0] sm:$0xf]
    %v430 = vld [vmem:[#allocation2 + $0x1d4] sm:$0xf]
    %v431 = vld [vmem:[#allocation2 + $0x1d8] sm:$0xf]
    %v432 = vld [vmem:[#allocation2 + $0x1dc] sm:$0xf]
    %v433 = vld [vmem:[#allocation2 + $0x1e0] sm:$0xf]
    %v434 = vld [vmem:[#allocation2 + $0x1e4] sm:$0xf]
    %v435 = vld [vmem:[#allocation2 + $0x1e8] sm:$0xf]
    %v436 = vld [vmem:[#allocation2 + $0x1ec] sm:$0xf]
    %v437 = vld [vmem:[#allocation2 + $0x1f0] sm:$0xf]
    %v438 = vld [vmem:[#allocation2 + $0x1f4] sm:$0xf]
    %v439 = vld [vmem:[#allocation2 + $0x1f8] sm:$0xf]
    %v440 = vld [vmem:[#allocation2 + $0x1fc] sm:$0xf]
    %v441 = vld [vmem:[#allocation2 + $0x200] sm:$0xf]
    %v442 = vld [vmem:[#allocation2 + $0x204] sm:$0xf]
    %v443 = vld [vmem:[#allocation2 + $0x208] sm:$0xf]
    %v444 = vld [vmem:[#allocation2 + $0x20c] sm:$0xf]
    %v445 = vld [vmem:[#allocation2 + $0x210] sm:$0xf]
    %v446 = vld [vmem:[#allocation2 + $0x214] sm:$0xf]
    %v447 = vld [vmem:[#allocation2 + $0x218] sm:$0xf]
    %v448 = vld [vmem:[#allocation2 + $0x21c] sm:$0xf]
    %v449 = vld [vmem:[#allocation2 + $0x220] sm:$0xf]
    %v450 = vld [vmem:[#allocation2 + $0x224] sm:$0xf]
    %v451 = vld [vmem:[#allocation2 + $0x228] sm:$0xf]
    %v452 = vld [vmem:[#allocation2 + $0x22c] sm:$0xf]
    %v453 = vld [vmem:[#allocation2 + $0x230] sm:$0xf]
    %v454 = vld [vmem:[#allocation2 + $0x234] sm:$0xf]
    %v455 = vld [vmem:[#allocation2 + $0x238] sm:$0xf]
    %v456 = vld [vmem:[#allocation2 + $0x23c] sm:$0xf]
    %v457 = vld [vmem:[#allocation2 + $0x240] sm:$0xf]
    %v458 = vld [vmem:[#allocation2 + $0x244] sm:$0xf]
    %v459 = vld [vmem:[#allocation2 + $0x248] sm:$0xf]
    %v460 = vld [vmem:[#allocation2 + $0x24c] sm:$0xf]
    %v461 = vld [vmem:[#allocation2 + $0x250] sm:$0xf]
    %v462 = vld [vmem:[#allocation2 + $0x254] sm:$0xf]
    %v463 = vld [vmem:[#allocation2 + $0x258] sm:$0xf]
    %v464 = vld [vmem:[#allocation2 + $0x25c] sm:$0xf]
    %v465 = vld [vmem:[#allocation2 + $0x260] sm:$0xf]
    %v466 = vld [vmem:[#allocation2 + $0x264] sm:$0xf]
    %v467 = vld [vmem:[#allocation2 + $0x268] sm:$0xf]
    %v468 = vld [vmem:[#allocation2 + $0x26c] sm:$0xf]
    %v469 = vld [vmem:[#allocation2 + $0x270] sm:$0xf]
    %v470 = vld [vmem:[#allocation2 + $0x274] sm:$0xf]
    %v471 = vld [vmem:[#allocation2 + $0x278] sm:$0xf]
    %v472 = vld [vmem:[#allocation2 + $0x27c] sm:$0xf]
    %v473 = vld [vmem:[#allocation2 + $0x280] sm:$0xf]
    %v474 = vld [vmem:[#allocation2 + $0x284] sm:$0xf]
    %v475 = vld [vmem:[#allocation2 + $0x288] sm:$0xf]
    %v476 = vld [vmem:[#allocation2 + $0x28c] sm:$0xf]
    %v477 = vld [vmem:[#allocation2 + $0x290] sm:$0xf]
    %v478 = vld [vmem:[#allocation2 + $0x294] sm:$0xf]
    %v479 = vld [vmem:[#allocation2 + $0x298] sm:$0xf]
    %v480 = vld [vmem:[#allocation2 + $0x29c] sm:$0xf]
    %v481 = vld [vmem:[#allocation2 + $0x2a0] sm:$0xf]
    %v482 = vld [vmem:[#allocation2 + $0x2a4] sm:$0xf]
    %v483 = vld [vmem:[#allocation2 + $0x2a8] sm:$0xf]
    %v484 = vld [vmem:[#allocation2 + $0x2ac] sm:$0xf]
    %v485 = vld [vmem:[#allocation2 + $0x2b0] sm:$0xf]
    %v486 = vld [vmem:[#allocation2 + $0x2b4] sm:$0xf]
    %v487 = vld [vmem:[#allocation2 + $0x2b8] sm:$0xf]
    %v488 = vld [vmem:[#allocation2 + $0x2bc] sm:$0xf]
    %v489 = vld [vmem:[#allocation2 + $0x2c0] sm:$0xf]
    %v490 = vld [vmem:[#allocation2 + $0x2c4] sm:$0xf]
    %v491 = vld [vmem:[#allocation2 + $0x2c8] sm:$0xf]
    %v492 = vld [vmem:[#allocation2 + $0x2cc] sm:$0xf]
    %v493 = vld [vmem:[#allocation2 + $0x2d0] sm:$0xf]
    %v494 = vld [vmem:[#allocation2 + $0x2d4] sm:$0xf]
    %v495 = vld [vmem:[#allocation2 + $0x2d8] sm:$0xf]
    %v496 = vld [vmem:[#allocation2 + $0x2dc] sm:$0xf]
    %v497 = vld [vmem:[#allocation2 + $0x2e0] sm:$0xf]
    %v498 = vld [vmem:[#allocation2 + $0x2e4] sm:$0xf]
    %v499 = vld [vmem:[#allocation2 + $0x2e8] sm:$0xf]
    %v500 = vld [vmem:[#allocation2 + $0x2ec] sm:$0xf]
    %v501 = vld [vmem:[#allocation2 + $0x2f0] sm:$0xf]
    %v502 = vld [vmem:[#allocation2 + $0x2f4] sm:$0xf]
    %v503 = vld [vmem:[#allocation2 + $0x2f8] sm:$0xf]
    %v504 = vld [vmem:[#allocation2 + $0x2fc] sm:$0xf]
    %v505 = vld [vmem:[#allocation2 + $0x300] sm:$0xf]
    %v506 = vld [vmem:[#allocation2 + $0x304] sm:$0xf]
    %v507 = vld [vmem:[#allocation2 + $0x308] sm:$0xf]
    %v508 = vld [vmem:[#allocation2 + $0x30c] sm:$0xf]
    %v509 = vld [vmem:[#allocation2 + $0x310] sm:$0xf]
    %v510 = vld [vmem:[#allocation2 + $0x314] sm:$0xf]
    %v511 = vld [vmem:[#allocation2 + $0x318] sm:$0xf]
    %v512 = vld [vmem:[#allocation2 + $0x31c] sm:$0xf]
    %v513 = vld [vmem:[#allocation2 + $0x320] sm:$0xf]
    %v514 = vld [vmem:[#allocation2 + $0x324] sm:$0xf]
    %v515 = vld [vmem:[#allocation2 + $0x328] sm:$0xf]
    %v516 = vld [vmem:[#allocation2 + $0x32c] sm:$0xf]
    %v517 = vld [vmem:[#allocation2 + $0x330] sm:$0xf]
    %v518 = vld [vmem:[#allocation2 + $0x334] sm:$0xf]
    %v519 = vld [vmem:[#allocation2 + $0x338] sm:$0xf]
    %v520 = vld [vmem:[#allocation2 + $0x33c] sm:$0xf]
    %v521 = vld [vmem:[#allocation2 + $0x340] sm:$0xf]
    %v522 = vld [vmem:[#allocation2 + $0x344] sm:$0xf]
    %v523 = vld [vmem:[#allocation2 + $0x348] sm:$0xf]
    %v524 = vld [vmem:[#allocation2 + $0x34c] sm:$0xf]
    %v525 = vld [vmem:[#allocation2 + $0x350] sm:$0xf]
    %v526 = vld [vmem:[#allocation2 + $0x354] sm:$0xf]
    %v527 = vld [vmem:[#allocation2 + $0x358] sm:$0xf]
    %v528 = vld [vmem:[#allocation2 + $0x35c] sm:$0xf]
    %v529 = vld [vmem:[#allocation2 + $0x360] sm:$0xf]
    %v530 = vld [vmem:[#allocation2 + $0x364] sm:$0xf]
    %v531 = vld [vmem:[#allocation2 + $0x368] sm:$0xf]
    %v532 = vld [vmem:[#allocation2 + $0x36c] sm:$0xf]
    %v533 = vld [vmem:[#allocation2 + $0x370] sm:$0xf]
    %v534 = vld [vmem:[#allocation2 + $0x374] sm:$0xf]
    %v535 = vld [vmem:[#allocation2 + $0x378] sm:$0xf]
    %v536 = vld [vmem:[#allocation2 + $0x37c] sm:$0xf]
    %v537 = vld [vmem:[#allocation2 + $0x380] sm:$0xf]
    %v538 = vld [vmem:[#allocation2 + $0x384] sm:$0xf]
    %v539 = vld [vmem:[#allocation2 + $0x388] sm:$0xf]
    %v540 = vld [vmem:[#allocation2 + $0x38c] sm:$0xf]
    %v541 = vld [vmem:[#allocation2 + $0x390] sm:$0xf]
    %v542 = vld [vmem:[#allocation2 + $0x394] sm:$0xf]
    %v543 = vld [vmem:[#allocation2 + $0x398] sm:$0xf]
    %v544 = vld [vmem:[#allocation2 + $0x39c] sm:$0xf]
    %v545 = vld [vmem:[#allocation2 + $0x3a0] sm:$0xf]
    %v546 = vld [vmem:[#allocation2 + $0x3a4] sm:$0xf]
    %v547 = vld [vmem:[#allocation2 + $0x3a8] sm:$0xf]
    %v548 = vld [vmem:[#allocation2 + $0x3ac] sm:$0xf]
    %v549 = vld [vmem:[#allocation2 + $0x3b0] sm:$0xf]
    %v550 = vld [vmem:[#allocation2 + $0x3b4] sm:$0xf]
    %v551 = vld [vmem:[#allocation2 + $0x3b8] sm:$0xf]
    %v552 = vld [vmem:[#allocation2 + $0x3bc] sm:$0xf]
    %v553 = vld [vmem:[#allocation2 + $0x3c0] sm:$0xf]
    %v554 = vld [vmem:[#allocation2 + $0x3c4] sm:$0xf]
    %v555 = vld [vmem:[#allocation2 + $0x3c8] sm:$0xf]
    %v556 = vld [vmem:[#allocation2 + $0x3cc] sm:$0xf]
    %v557 = vld [vmem:[#allocation2 + $0x3d0] sm:$0xf]
    %v558 = vld [vmem:[#allocation2 + $0x3d4] sm:$0xf]
    %v559 = vld [vmem:[#allocation2 + $0x3d8] sm:$0xf]
    %v560 = vld [vmem:[#allocation2 + $0x3dc] sm:$0xf]
    %v561 = vld [vmem:[#allocation2 + $0x3e0] sm:$0xf]
    %v562 = vld [vmem:[#allocation2 + $0x3e4] sm:$0xf]
    %v563 = vld [vmem:[#allocation2 + $0x3e8] sm:$0xf]
    %v564 = vld [vmem:[#allocation2 + $0x3ec] sm:$0xf]
    %v565 = vld [vmem:[#allocation2 + $0x3f0] sm:$0xf]
    %v566 = vld [vmem:[#allocation2 + $0x3f4] sm:$0xf]
    %v567 = vld [vmem:[#allocation2 + $0x3f8] sm:$0xf]
    %v568 = vld [vmem:[#allocation2 + $0x3fc] sm:$0xf]
    %v569 = vld [vmem:[#allocation2 + $0x400] sm:$0xf]
    %v570 = vld [vmem:[#allocation2 + $0x404] sm:$0xf]
    %v571 = vld [vmem:[#allocation2 + $0x408] sm:$0xf]
    %v572 = vld [vmem:[#allocation2 + $0x40c] sm:$0xf]
    %v573 = vld [vmem:[#allocation2 + $0x410] sm:$0xf]
    %v574 = vld [vmem:[#allocation2 + $0x414] sm:$0xf]
    %v575 = vld [vmem:[#allocation2 + $0x418] sm:$0xf]
    %v576 = vld [vmem:[#allocation2 + $0x41c] sm:$0xf]
    %v577 = vld [vmem:[#allocation2 + $0x420] sm:$0xf]
    %v578 = vld [vmem:[#allocation2 + $0x424] sm:$0xf]
    %v579 = vld [vmem:[#allocation2 + $0x428] sm:$0xf]
    %v580 = vld [vmem:[#allocation2 + $0x42c] sm:$0xf]
    %v581 = vld [vmem:[#allocation2 + $0x430] sm:$0xf]
    %v582 = vld [vmem:[#allocation2 + $0x434] sm:$0xf]
    %v583 = vld [vmem:[#allocation2 + $0x438] sm:$0xf]
    %v584 = vld [vmem:[#allocation2 + $0x43c] sm:$0xf]
    %v585 = vld [vmem:[#allocation2 + $0x440] sm:$0xf]
    %v586 = vld [vmem:[#allocation2 + $0x444] sm:$0xf]
    %v587 = vld [vmem:[#allocation2 + $0x448] sm:$0xf]
    %v588 = vld [vmem:[#allocation2 + $0x44c] sm:$0xf]
    %v589 = vld [vmem:[#allocation2 + $0x450] sm:$0xf]
    %v590 = vld [vmem:[#allocation2 + $0x454] sm:$0xf]
    %v591 = vld [vmem:[#allocation2 + $0x458] sm:$0xf]
    %v592 = vld [vmem:[#allocation2 + $0x45c] sm:$0xf]
    %v593 = vld [vmem:[#allocation2 + $0x460] sm:$0xf]
    %v594 = vld [vmem:[#allocation2 + $0x464] sm:$0xf]
    %v595 = vld [vmem:[#allocation2 + $0x468] sm:$0xf]
    %v596 = vld [vmem:[#allocation2 + $0x46c] sm:$0xf]
    %v597 = vld [vmem:[#allocation2 + $0x470] sm:$0xf]
    %v598 = vld [vmem:[#allocation2 + $0x474] sm:$0xf]
    %v599 = vld [vmem:[#allocation2 + $0x478] sm:$0xf]
    %v600 = vld [vmem:[#allocation2 + $0x47c] sm:$0xf]
    %v601 = vld [vmem:[#allocation2 + $0x480] sm:$0xf]
    %v602 = vld [vmem:[#allocation2 + $0x484] sm:$0xf]
    %v603 = vld [vmem:[#allocation2 + $0x488] sm:$0xf]
    %v604 = vld [vmem:[#allocation2 + $0x48c] sm:$0xf]
    %v605 = vld [vmem:[#allocation2 + $0x490] sm:$0xf]
    %v606 = vld [vmem:[#allocation2 + $0x494] sm:$0xf]
    %v607 = vld [vmem:[#allocation2 + $0x498] sm:$0xf]
    %v608 = vld [vmem:[#allocation2 + $0x49c] sm:$0xf]
    %v609 = vld [vmem:[#allocation2 + $0x4a0] sm:$0xf]
    %v610 = vld [vmem:[#allocation2 + $0x4a4] sm:$0xf]
    %v611 = vld [vmem:[#allocation2 + $0x4a8] sm:$0xf]
    %v612 = vld [vmem:[#allocation2 + $0x4ac] sm:$0xf]
    %v613 = vld [vmem:[#allocation2 + $0x4b0] sm:$0xf]
    %v614 = vld [vmem:[#allocation2 + $0x4b4] sm:$0xf]
    %v615 = vld [vmem:[#allocation2 + $0x4b8] sm:$0xf]
    %v616 = vld [vmem:[#allocation2 + $0x4bc] sm:$0xf]
    %v617 = vld [vmem:[#allocation2 + $0x4c0] sm:$0xf]
    %v618 = vld [vmem:[#allocation2 + $0x4c4] sm:$0xf]
    %v619 = vld [vmem:[#allocation2 + $0x4c8] sm:$0xf]
    %v620 = vld [vmem:[#allocation2 + $0x4cc] sm:$0xf]
    %v621 = vld [vmem:[#allocation2 + $0x4d0] sm:$0xf]
    %v622 = vld [vmem:[#allocation2 + $0x4d4] sm:$0xf]
    %v623 = vld [vmem:[#allocation2 + $0x4d8] sm:$0xf]
    %v624 = vld [vmem:[#allocation2 + $0x4dc] sm:$0xf]
    %v625 = vld [vmem:[#allocation2 + $0x4e0] sm:$0xf]
    %v626 = vld [vmem:[#allocation2 + $0x4e4] sm:$0xf]
    %v627 = vld [vmem:[#allocation2 + $0x4e8] sm:$0xf]
    %v628 = vld [vmem:[#allocation2 + $0x4ec] sm:$0xf]
    %v629 = vld [vmem:[#allocation2 + $0x4f0] sm:$0xf]
    %v630 = vld [vmem:[#allocation2 + $0x4f4] sm:$0xf]
    %v631 = vld [vmem:[#allocation2 + $0x4f8] sm:$0xf]
    %v632 = vld [vmem:[#allocation2 + $0x4fc] sm:$0xf]
    %v633 = vld [vmem:[#allocation2 + $0x500] sm:$0xf]
    %v634 = vld [vmem:[#allocation2 + $0x504] sm:$0xf]
    %v635 = vld [vmem:[#allocation2 + $0x508] sm:$0xf]
    %v636 = vld [vmem:[#allocation2 + $0x50c] sm:$0xf]
    %v637 = vld [vmem:[#allocation2 + $0x510] sm:$0xf]
    %v638 = vld [vmem:[#allocation2 + $0x514] sm:$0xf]
    %v639 = vld [vmem:[#allocation2 + $0x518] sm:$0xf]
    %v640 = vld [vmem:[#allocation2 + $0x51c] sm:$0xf]
    %v641 = vld [vmem:[#allocation2 + $0x520] sm:$0xf]
    %v642 = vld [vmem:[#allocation2 + $0x524] sm:$0xf]
    %v643 = vld [vmem:[#allocation2 + $0x528] sm:$0xf]
    %v644 = vld [vmem:[#allocation2 + $0x52c] sm:$0xf]
    %v645 = vld [vmem:[#allocation2 + $0x530] sm:$0xf]
    %v646 = vld [vmem:[#allocation2 + $0x534] sm:$0xf]
    %v647 = vld [vmem:[#allocation2 + $0x538] sm:$0xf]
    %v648 = vld [vmem:[#allocation2 + $0x53c] sm:$0xf]
    %v649 = vld [vmem:[#allocation2 + $0x540] sm:$0xf]
    %v650 = vld [vmem:[#allocation2 + $0x544] sm:$0xf]
    %v651 = vld [vmem:[#allocation2 + $0x548] sm:$0xf]
    %v652 = vld [vmem:[#allocation2 + $0x54c] sm:$0xf]
    %v653 = vld [vmem:[#allocation2 + $0x550] sm:$0xf]
    %v654 = vld [vmem:[#allocation2 + $0x554] sm:$0xf]
    %v655 = vld [vmem:[#allocation2 + $0x558] sm:$0xf]
    %v656 = vld [vmem:[#allocation2 + $0x55c] sm:$0xf]
    %v657 = vld [vmem:[#allocation2 + $0x560] sm:$0xf]
    %v658 = vld [vmem:[#allocation2 + $0x564] sm:$0xf]
    %v659 = vld [vmem:[#allocation2 + $0x568] sm:$0xf]
    %v660 = vld [vmem:[#allocation2 + $0x56c] sm:$0xf]
    %v661 = vld [vmem:[#allocation2 + $0x570] sm:$0xf]
    %v662 = vld [vmem:[#allocation2 + $0x574] sm:$0xf]
    %v663 = vld [vmem:[#allocation2 + $0x578] sm:$0xf]
    %v664 = vld [vmem:[#allocation2 + $0x57c] sm:$0xf]
    %v665 = vld [vmem:[#allocation2 + $0x580] sm:$0xf]
    %v666 = vld [vmem:[#allocation2 + $0x584] sm:$0xf]
    %v667 = vld [vmem:[#allocation2 + $0x588] sm:$0xf]
    %v668 = vld [vmem:[#allocation2 + $0x58c] sm:$0xf]
    %v669 = vld [vmem:[#allocation2 + $0x590] sm:$0xf]
    %v670 = vld [vmem:[#allocation2 + $0x594] sm:$0xf]
    %v671 = vld [vmem:[#allocation2 + $0x598] sm:$0xf]
    %v672 = vld [vmem:[#allocation2 + $0x59c] sm:$0xf]
    %v673 = vld [vmem:[#allocation2 + $0x5a0] sm:$0xf]
    %v674 = vld [vmem:[#allocation2 + $0x5a4] sm:$0xf]
    %v675 = vld [vmem:[#allocation2 + $0x5a8] sm:$0xf]
    %v676 = vld [vmem:[#allocation2 + $0x5ac] sm:$0xf]
    %v677 = vld [vmem:[#allocation2 + $0x5b0] sm:$0xf]
    %v678 = vld [vmem:[#allocation2 + $0x5b4] sm:$0xf]
    %v679 = vld [vmem:[#allocation2 + $0x5b8] sm:$0xf]
    %v680 = vld [vmem:[#allocation2 + $0x5bc] sm:$0xf]
    %v681 = vld [vmem:[#allocation2 + $0x5c0] sm:$0xf]
    %v682 = vld [vmem:[#allocation2 + $0x5c4] sm:$0xf]
    %v683 = vld [vmem:[#allocation2 + $0x5c8] sm:$0xf]
    %v684 = vld [vmem:[#allocation2 + $0x5cc] sm:$0xf]
    %v685 = vld [vmem:[#allocation2 + $0x5d0] sm:$0xf]
    %v686 = vld [vmem:[#allocation2 + $0x5d4] sm:$0xf]
    %v687 = vld [vmem:[#allocation2 + $0x5d8] sm:$0xf]
    %v688 = vld [vmem:[#allocation2 + $0x5dc] sm:$0xf]
    %v689 = vld [vmem:[#allocation2 + $0x5e0] sm:$0xf]
    %v690 = vld [vmem:[#allocation2 + $0x5e4] sm:$0xf]
    %v691 = vld [vmem:[#allocation2 + $0x5e8] sm:$0xf]
    %v692 = vld [vmem:[#allocation2 + $0x5ec] sm:$0xf]
    %v693 = vld [vmem:[#allocation2 + $0x5f0] sm:$0xf]
    %v694 = vld [vmem:[#allocation2 + $0x5f4] sm:$0xf]
    %v695 = vld [vmem:[#allocation2 + $0x5f8] sm:$0xf]
    %v696 = vld [vmem:[#allocation2 + $0x5fc] sm:$0xf]
    %v697 = vld [vmem:[%s2] sm:$0x1]
    %v699 = vperm.slane %v697, 0
    %v1085 = vunpack.c.l.b16 %v313
    %v1086 = vunpack.c.l.b16 %v314
    %v1087 = vunpack.c.l.b16 %v315
    %v1088 = vunpack.c.l.b16 %v316
    %v1089 = vunpack.c.l.b16 %v317
    %v1090 = vunpack.c.l.b16 %v318
    %v1091 = vunpack.c.l.b16 %v319
    %v1092 = vunpack.c.l.b16 %v320
    %v1093 = vunpack.c.l.b16 %v321
    %v1094 = vunpack.c.l.b16 %v322
    %v1095 = vunpack.c.l.b16 %v323
    %v1096 = vunpack.c.l.b16 %v324
    %v1097 = vunpack.c.l.b16 %v325
    %v1098 = vunpack.c.l.b16 %v326
    %v1099 = vunpack.c.l.b16 %v327
    %v1100 = vunpack.c.l.b16 %v328
    %v1101 = vunpack.c.l.b16 %v329
    %v1102 = vunpack.c.l.b16 %v330
    %v1103 = vunpack.c.l.b16 %v331
    %v1104 = vunpack.c.l.b16 %v332
    %v1105 = vunpack.c.l.b16 %v333
    %v1106 = vunpack.c.l.b16 %v334
    %v1107 = vunpack.c.l.b16 %v335
    %v1108 = vunpack.c.l.b16 %v336
    %v1109 = vunpack.c.l.b16 %v337
    %v1110 = vunpack.c.l.b16 %v338
    %v1111 = vunpack.c.l.b16 %v339
    %v1112 = vunpack.c.l.b16 %v340
    %v1113 = vunpack.c.l.b16 %v341
    %v1114 = vunpack.c.l.b16 %v342
    %v1115 = vunpack.c.l.b16 %v343
    %v1116 = vunpack.c.l.b16 %v344
    %v1117 = vunpack.c.l.b16 %v345
    %v1118 = vunpack.c.l.b16 %v346
    %v1119 = vunpack.c.l.b16 %v347
    %v1120 = vunpack.c.l.b16 %v348
    %v1121 = vunpack.c.l.b16 %v349
    %v1122 = vunpack.c.l.b16 %v350
    %v1123 = vunpack.c.l.b16 %v351
    %v1124 = vunpack.c.l.b16 %v352
    %v1125 = vunpack.c.l.b16 %v353
    %v1126 = vunpack.c.l.b16 %v354
    %v1127 = vunpack.c.l.b16 %v355
    %v1128 = vunpack.c.l.b16 %v356
    %v1129 = vunpack.c.l.b16 %v357
    %v1130 = vunpack.c.l.b16 %v358
    %v1131 = vunpack.c.l.b16 %v359
    %v1132 = vunpack.c.l.b16 %v360
    %v1133 = vunpack.c.l.b16 %v361
    %v1134 = vunpack.c.l.b16 %v362
    %v1135 = vunpack.c.l.b16 %v363
    %v1136 = vunpack.c.l.b16 %v364
    %v1137 = vunpack.c.l.b16 %v365
    %v1138 = vunpack.c.l.b16 %v366
    %v1139 = vunpack.c.l.b16 %v367
    %v1140 = vunpack.c.l.b16 %v368
    %v1141 = vunpack.c.l.b16 %v369
    %v1142 = vunpack.c.l.b16 %v370
    %v1143 = vunpack.c.l.b16 %v371
    %v1144 = vunpack.c.l.b16 %v372
    %v1145 = vunpack.c.l.b16 %v373
    %v1146 = vunpack.c.l.b16 %v374
    %v1147 = vunpack.c.l.b16 %v375
    %v1148 = vunpack.c.l.b16 %v376
    %v1149 = vunpack.c.l.b16 %v377
    %v1150 = vunpack.c.l.b16 %v378
    %v1151 = vunpack.c.l.b16 %v379
    %v1152 = vunpack.c.l.b16 %v380
    %v1153 = vunpack.c.l.b16 %v381
    %v1154 = vunpack.c.l.b16 %v382
    %v1155 = vunpack.c.l.b16 %v383
    %v1156 = vunpack.c.l.b16 %v384
    %v1157 = vunpack.c.l.b16 %v385
    %v1158 = vunpack.c.l.b16 %v386
    %v1159 = vunpack.c.l.b16 %v387
    %v1160 = vunpack.c.l.b16 %v388
    %v1161 = vunpack.c.l.b16 %v389
    %v1162 = vunpack.c.l.b16 %v390
    %v1163 = vunpack.c.l.b16 %v391
    %v1164 = vunpack.c.l.b16 %v392
    %v1165 = vunpack.c.l.b16 %v393
    %v1166 = vunpack.c.l.b16 %v394
    %v1167 = vunpack.c.l.b16 %v395
    %v1168 = vunpack.c.l.b16 %v396
    %v1169 = vunpack.c.l.b16 %v397
    %v1170 = vunpack.c.l.b16 %v398
    %v1171 = vunpack.c.l.b16 %v399
    %v1172 = vunpack.c.l.b16 %v400
    %v1173 = vunpack.c.l.b16 %v401
    %v1174 = vunpack.c.l.b16 %v402
    %v1175 = vunpack.c.l.b16 %v403
    %v1176 = vunpack.c.l.b16 %v404
    %v1177 = vunpack.c.l.b16 %v405
    %v1178 = vunpack.c.l.b16 %v406
    %v1179 = vunpack.c.l.b16 %v407
    %v1180 = vunpack.c.l.b16 %v408
    %v1181 = vunpack.c.l.b16 %v409
    %v1182 = vunpack.c.l.b16 %v410
    %v1183 = vunpack.c.l.b16 %v411
    %v1184 = vunpack.c.l.b16 %v412
    %v1185 = vunpack.c.l.b16 %v413
    %v1186 = vunpack.c.l.b16 %v414
    %v1187 = vunpack.c.l.b16 %v415
    %v1188 = vunpack.c.l.b16 %v416
    %v1189 = vunpack.c.l.b16 %v417
    %v1190 = vunpack.c.l.b16 %v418
    %v1191 = vunpack.c.l.b16 %v419
    %v1192 = vunpack.c.l.b16 %v420
    %v1193 = vunpack.c.l.b16 %v421
    %v1194 = vunpack.c.l.b16 %v422
    %v1195 = vunpack.c.l.b16 %v423
    %v1196 = vunpack.c.l.b16 %v424
    %v1197 = vunpack.c.l.b16 %v425
    %v1198 = vunpack.c.l.b16 %v426
    %v1199 = vunpack.c.l.b16 %v427
    %v1200 = vunpack.c.l.b16 %v428
    %v1201 = vunpack.c.l.b16 %v429
    %v1202 = vunpack.c.l.b16 %v430
    %v1203 = vunpack.c.l.b16 %v431
    %v1204 = vunpack.c.l.b16 %v432
    %v1205 = vunpack.c.l.b16 %v433
    %v1206 = vunpack.c.l.b16 %v434
    %v1207 = vunpack.c.l.b16 %v435
    %v1208 = vunpack.c.l.b16 %v436
    %v1209 = vunpack.c.l.b16 %v437
    %v1210 = vunpack.c.l.b16 %v438
    %v1211 = vunpack.c.l.b16 %v439
    %v1212 = vunpack.c.l.b16 %v440
    %v1213 = vunpack.c.l.b16 %v441
    %v1214 = vunpack.c.l.b16 %v442
    %v1215 = vunpack.c.l.b16 %v443
    %v1216 = vunpack.c.l.b16 %v444
    %v1217 = vunpack.c.l.b16 %v445
    %v1218 = vunpack.c.l.b16 %v446
    %v1219 = vunpack.c.l.b16 %v447
    %v1220 = vunpack.c.l.b16 %v448
    %v1221 = vunpack.c.l.b16 %v449
    %v1222 = vunpack.c.l.b16 %v450
    %v1223 = vunpack.c.l.b16 %v451
    %v1224 = vunpack.c.l.b16 %v452
    %v1225 = vunpack.c.l.b16 %v453
    %v1226 = vunpack.c.l.b16 %v454
    %v1227 = vunpack.c.l.b16 %v455
    %v1228 = vunpack.c.l.b16 %v456
    %v1229 = vunpack.c.l.b16 %v457
    %v1230 = vunpack.c.l.b16 %v458
    %v1231 = vunpack.c.l.b16 %v459
    %v1232 = vunpack.c.l.b16 %v460
    %v1233 = vunpack.c.l.b16 %v461
    %v1234 = vunpack.c.l.b16 %v462
    %v1235 = vunpack.c.l.b16 %v463
    %v1236 = vunpack.c.l.b16 %v464
    %v1237 = vunpack.c.l.b16 %v465
    %v1238 = vunpack.c.l.b16 %v466
    %v1239 = vunpack.c.l.b16 %v467
    %v1240 = vunpack.c.l.b16 %v468
    %v1241 = vunpack.c.l.b16 %v469
    %v1242 = vunpack.c.l.b16 %v470
    %v1243 = vunpack.c.l.b16 %v471
    %v1244 = vunpack.c.l.b16 %v472
    %v1245 = vunpack.c.l.b16 %v473
    %v1246 = vunpack.c.l.b16 %v474
    %v1247 = vunpack.c.l.b16 %v475
    %v1248 = vunpack.c.l.b16 %v476
    %v1249 = vunpack.c.l.b16 %v477
    %v1250 = vunpack.c.l.b16 %v478
    %v1251 = vunpack.c.l.b16 %v479
    %v1252 = vunpack.c.l.b16 %v480
    %v1253 = vunpack.c.l.b16 %v481
    %v1254 = vunpack.c.l.b16 %v482
    %v1255 = vunpack.c.l.b16 %v483
    %v1256 = vunpack.c.l.b16 %v484
    %v1257 = vunpack.c.l.b16 %v485
    %v1258 = vunpack.c.l.b16 %v486
    %v1259 = vunpack.c.l.b16 %v487
    %v1260 = vunpack.c.l.b16 %v488
    %v1261 = vunpack.c.l.b16 %v489
    %v1262 = vunpack.c.l.b16 %v490
    %v1263 = vunpack.c.l.b16 %v491
    %v1264 = vunpack.c.l.b16 %v492
    %v1265 = vunpack.c.l.b16 %v493
    %v1266 = vunpack.c.l.b16 %v494
    %v1267 = vunpack.c.l.b16 %v495
    %v1268 = vunpack.c.l.b16 %v496
    %v1269 = vunpack.c.l.b16 %v497
    %v1270 = vunpack.c.l.b16 %v498
    %v1271 = vunpack.c.l.b16 %v499
    %v1272 = vunpack.c.l.b16 %v500
    %v1273 = vunpack.c.l.b16 %v501
    %v1274 = vunpack.c.l.b16 %v502
    %v1275 = vunpack.c.l.b16 %v503
    %v1276 = vunpack.c.l.b16 %v504
    %v1277 = vunpack.c.l.b16 %v505
    %v1278 = vunpack.c.l.b16 %v506
    %v1279 = vunpack.c.l.b16 %v507
    %v1280 = vunpack.c.l.b16 %v508
    %v1281 = vunpack.c.l.b16 %v509
    %v1282 = vunpack.c.l.b16 %v510
    %v1283 = vunpack.c.l.b16 %v511
    %v1284 = vunpack.c.l.b16 %v512
    %v1285 = vunpack.c.l.b16 %v513
    %v1286 = vunpack.c.l.b16 %v514
    %v1287 = vunpack.c.l.b16 %v515
    %v1288 = vunpack.c.l.b16 %v516
    %v1289 = vunpack.c.l.b16 %v517
    %v1290 = vunpack.c.l.b16 %v518
    %v1291 = vunpack.c.l.b16 %v519
    %v1292 = vunpack.c.l.b16 %v520
    %v1293 = vunpack.c.l.b16 %v521
    %v1294 = vunpack.c.l.b16 %v522
    %v1295 = vunpack.c.l.b16 %v523
    %v1296 = vunpack.c.l.b16 %v524
    %v1297 = vunpack.c.l.b16 %v525
    %v1298 = vunpack.c.l.b16 %v526
    %v1299 = vunpack.c.l.b16 %v527
    %v1300 = vunpack.c.l.b16 %v528
    %v1301 = vunpack.c.l.b16 %v529
    %v1302 = vunpack.c.l.b16 %v530
    %v1303 = vunpack.c.l.b16 %v531
    %v1304 = vunpack.c.l.b16 %v532
    %v1305 = vunpack.c.l.b16 %v533
    %v1306 = vunpack.c.l.b16 %v534
    %v1307 = vunpack.c.l.b16 %v535
    %v1308 = vunpack.c.l.b16 %v536
    %v1309 = vunpack.c.l.b16 %v537
    %v1310 = vunpack.c.l.b16 %v538
    %v1311 = vunpack.c.l.b16 %v539
    %v1312 = vunpack.c.l.b16 %v540
    %v1313 = vunpack.c.l.b16 %v541
    %v1314 = vunpack.c.l.b16 %v542
    %v1315 = vunpack.c.l.b16 %v543
    %v1316 = vunpack.c.l.b16 %v544
    %v1317 = vunpack.c.l.b16 %v545
    %v1318 = vunpack.c.l.b16 %v546
    %v1319 = vunpack.c.l.b16 %v547
    %v1320 = vunpack.c.l.b16 %v548
    %v1321 = vunpack.c.l.b16 %v549
    %v1322 = vunpack.c.l.b16 %v550
    %v1323 = vunpack.c.l.b16 %v551
    %v1324 = vunpack.c.l.b16 %v552
    %v1325 = vunpack.c.l.b16 %v553
    %v1326 = vunpack.c.l.b16 %v554
    %v1327 = vunpack.c.l.b16 %v555
    %v1328 = vunpack.c.l.b16 %v556
    %v1329 = vunpack.c.l.b16 %v557
    %v1330 = vunpack.c.l.b16 %v558
    %v1331 = vunpack.c.l.b16 %v559
    %v1332 = vunpack.c.l.b16 %v560
    %v1333 = vunpack.c.l.b16 %v561
    %v1334 = vunpack.c.l.b16 %v562
    %v1335 = vunpack.c.l.b16 %v563
    %v1336 = vunpack.c.l.b16 %v564
    %v1337 = vunpack.c.l.b16 %v565
    %v1338 = vunpack.c.l.b16 %v566
    %v1339 = vunpack.c.l.b16 %v567
    %v1340 = vunpack.c.l.b16 %v568
    %v1341 = vunpack.c.l.b16 %v569
    %v1342 = vunpack.c.l.b16 %v570
    %v1343 = vunpack.c.l.b16 %v571
    %v1344 = vunpack.c.l.b16 %v572
    %v1345 = vunpack.c.l.b16 %v573
    %v1346 = vunpack.c.l.b16 %v574
    %v1347 = vunpack.c.l.b16 %v575
    %v1348 = vunpack.c.l.b16 %v576
    %v1349 = vunpack.c.l.b16 %v577
    %v1350 = vunpack.c.l.b16 %v578
    %v1351 = vunpack.c.l.b16 %v579
    %v1352 = vunpack.c.l.b16 %v580
    %v1353 = vunpack.c.l.b16 %v581
    %v1354 = vunpack.c.l.b16 %v582
    %v1355 = vunpack.c.l.b16 %v583
    %v1356 = vunpack.c.l.b16 %v584
    %v1357 = vunpack.c.l.b16 %v585
    %v1358 = vunpack.c.l.b16 %v586
    %v1359 = vunpack.c.l.b16 %v587
    %v1360 = vunpack.c.l.b16 %v588
    %v1361 = vunpack.c.l.b16 %v589
    %v1362 = vunpack.c.l.b16 %v590
    %v1363 = vunpack.c.l.b16 %v591
    %v1364 = vunpack.c.l.b16 %v592
    %v1365 = vunpack.c.l.b16 %v593
    %v1366 = vunpack.c.l.b16 %v594
    %v1367 = vunpack.c.l.b16 %v595
    %v1368 = vunpack.c.l.b16 %v596
    %v1369 = vunpack.c.l.b16 %v597
    %v1370 = vunpack.c.l.b16 %v598
    %v1371 = vunpack.c.l.b16 %v599
    %v1372 = vunpack.c.l.b16 %v600
    %v1373 = vunpack.c.l.b16 %v601
    %v1374 = vunpack.c.l.b16 %v602
    %v1375 = vunpack.c.l.b16 %v603
    %v1376 = vunpack.c.l.b16 %v604
    %v1377 = vunpack.c.l.b16 %v605
    %v1378 = vunpack.c.l.b16 %v606
    %v1379 = vunpack.c.l.b16 %v607
    %v1380 = vunpack.c.l.b16 %v608
    %v1381 = vunpack.c.l.b16 %v609
    %v1382 = vunpack.c.l.b16 %v610
    %v1383 = vunpack.c.l.b16 %v611
    %v1384 = vunpack.c.l.b16 %v612
    %v1385 = vunpack.c.l.b16 %v613
    %v1386 = vunpack.c.l.b16 %v614
    %v1387 = vunpack.c.l.b16 %v615
    %v1388 = vunpack.c.l.b16 %v616
    %v1389 = vunpack.c.l.b16 %v617
    %v1390 = vunpack.c.l.b16 %v618
    %v1391 = vunpack.c.l.b16 %v619
    %v1392 = vunpack.c.l.b16 %v620
    %v1393 = vunpack.c.l.b16 %v621
    %v1394 = vunpack.c.l.b16 %v622
    %v1395 = vunpack.c.l.b16 %v623
    %v1396 = vunpack.c.l.b16 %v624
    %v1397 = vunpack.c.l.b16 %v625
    %v1398 = vunpack.c.l.b16 %v626
    %v1399 = vunpack.c.l.b16 %v627
    %v1400 = vunpack.c.l.b16 %v628
    %v1401 = vunpack.c.l.b16 %v629
    %v1402 = vunpack.c.l.b16 %v630
    %v1403 = vunpack.c.l.b16 %v631
    %v1404 = vunpack.c.l.b16 %v632
    %v1405 = vunpack.c.l.b16 %v633
    %v1406 = vunpack.c.l.b16 %v634
    %v1407 = vunpack.c.l.b16 %v635
    %v1408 = vunpack.c.l.b16 %v636
    %v1409 = vunpack.c.l.b16 %v637
    %v1410 = vunpack.c.l.b16 %v638
    %v1411 = vunpack.c.l.b16 %v639
    %v1412 = vunpack.c.l.b16 %v640
    %v1413 = vunpack.c.l.b16 %v641
    %v1414 = vunpack.c.l.b16 %v642
    %v1415 = vunpack.c.l.b16 %v643
    %v1416 = vunpack.c.l.b16 %v644
    %v1417 = vunpack.c.l.b16 %v645
    %v1418 = vunpack.c.l.b16 %v646
    %v1419 = vunpack.c.l.b16 %v647
    %v1420 = vunpack.c.l.b16 %v648
    %v1421 = vunpack.c.l.b16 %v649
    %v1422 = vunpack.c.l.b16 %v650
    %v1423 = vunpack.c.l.b16 %v651
    %v1424 = vunpack.c.l.b16 %v652
    %v1425 = vunpack.c.l.b16 %v653
    %v1426 = vunpack.c.l.b16 %v654
    %v1427 = vunpack.c.l.b16 %v655
    %v1428 = vunpack.c.l.b16 %v656
    %v1429 = vunpack.c.l.b16 %v657
    %v1430 = vunpack.c.l.b16 %v658
    %v1431 = vunpack.c.l.b16 %v659
    %v1432 = vunpack.c.l.b16 %v660
    %v1433 = vunpack.c.l.b16 %v661
    %v1434 = vunpack.c.l.b16 %v662
    %v1435 = vunpack.c.l.b16 %v663
    %v1436 = vunpack.c.l.b16 %v664
    %v1437 = vunpack.c.l.b16 %v665
    %v1438 = vunpack.c.l.b16 %v666
    %v1439 = vunpack.c.l.b16 %v667
    %v1440 = vunpack.c.l.b16 %v668
    %v1441 = vunpack.c.l.b16 %v669
    %v1442 = vunpack.c.l.b16 %v670
    %v1443 = vunpack.c.l.b16 %v671
    %v1444 = vunpack.c.l.b16 %v672
    %v1445 = vunpack.c.l.b16 %v673
    %v1446 = vunpack.c.l.b16 %v674
    %v1447 = vunpack.c.l.b16 %v675
    %v1448 = vunpack.c.l.b16 %v676
    %v1449 = vunpack.c.l.b16 %v677
    %v1450 = vunpack.c.l.b16 %v678
    %v1451 = vunpack.c.l.b16 %v679
    %v1452 = vunpack.c.l.b16 %v680
    %v1453 = vunpack.c.l.b16 %v681
    %v1454 = vunpack.c.l.b16 %v682
    %v1455 = vunpack.c.l.b16 %v683
    %v1456 = vunpack.c.l.b16 %v684
    %v1457 = vunpack.c.l.b16 %v685
    %v1458 = vunpack.c.l.b16 %v686
    %v1459 = vunpack.c.l.b16 %v687
    %v1460 = vunpack.c.l.b16 %v688
    %v1461 = vunpack.c.l.b16 %v689
    %v1462 = vunpack.c.l.b16 %v690
    %v1463 = vunpack.c.l.b16 %v691
    %v1464 = vunpack.c.l.b16 %v692
    %v1465 = vunpack.c.l.b16 %v693
    %v1466 = vunpack.c.l.b16 %v694
    %v1467 = vunpack.c.l.b16 %v695
    %v1468 = vunpack.c.l.b16 %v696
    %v1469 = vpack.c.b16 %v1086, %v1085
    %v1470 = vpack.c.b16 %v1088, %v1087
    %v1471 = vpack.c.b16 %v1090, %v1089
    %v1472 = vpack.c.b16 %v1092, %v1091
    %v1473 = vpack.c.b16 %v1094, %v1093
    %v1474 = vpack.c.b16 %v1096, %v1095
    %v1475 = vpack.c.b16 %v1098, %v1097
    %v1476 = vpack.c.b16 %v1100, %v1099
    %v1477 = vpack.c.b16 %v1102, %v1101
    %v1478 = vpack.c.b16 %v1104, %v1103
    %v1479 = vpack.c.b16 %v1106, %v1105
    %v1480 = vpack.c.b16 %v1108, %v1107
    %v1481 = vpack.c.b16 %v1110, %v1109
    %v1482 = vpack.c.b16 %v1112, %v1111
    %v1483 = vpack.c.b16 %v1114, %v1113
    %v1484 = vpack.c.b16 %v1116, %v1115
    %v1485 = vpack.c.b16 %v1118, %v1117
    %v1486 = vpack.c.b16 %v1120, %v1119
    %v1487 = vpack.c.b16 %v1122, %v1121
    %v1488 = vpack.c.b16 %v1124, %v1123
    %v1489 = vpack.c.b16 %v1126, %v1125
    %v1490 = vpack.c.b16 %v1128, %v1127
    %v1491 = vpack.c.b16 %v1130, %v1129
    %v1492 = vpack.c.b16 %v1132, %v1131
    %v1493 = vpack.c.b16 %v1134, %v1133
    %v1494 = vpack.c.b16 %v1136, %v1135
    %v1495 = vpack.c.b16 %v1138, %v1137
    %v1496 = vpack.c.b16 %v1140, %v1139
    %v1497 = vpack.c.b16 %v1142, %v1141
    %v1498 = vpack.c.b16 %v1144, %v1143
    %v1499 = vpack.c.b16 %v1146, %v1145
    %v1500 = vpack.c.b16 %v1148, %v1147
    %v1501 = vpack.c.b16 %v1150, %v1149
    %v1502 = vpack.c.b16 %v1152, %v1151
    %v1503 = vpack.c.b16 %v1154, %v1153
    %v1504 = vpack.c.b16 %v1156, %v1155
    %v1505 = vpack.c.b16 %v1158, %v1157
    %v1506 = vpack.c.b16 %v1160, %v1159
    %v1507 = vpack.c.b16 %v1162, %v1161
    %v1508 = vpack.c.b16 %v1164, %v1163
    %v1509 = vpack.c.b16 %v1166, %v1165
    %v1510 = vpack.c.b16 %v1168, %v1167
    %v1511 = vpack.c.b16 %v1170, %v1169
    %v1512 = vpack.c.b16 %v1172, %v1171
    %v1513 = vpack.c.b16 %v1174, %v1173
    %v1514 = vpack.c.b16 %v1176, %v1175
    %v1515 = vpack.c.b16 %v1178, %v1177
    %v1516 = vpack.c.b16 %v1180, %v1179
    %v1517 = vpack.c.b16 %v1182, %v1181
    %v1518 = vpack.c.b16 %v1184, %v1183
    %v1519 = vpack.c.b16 %v1186, %v1185
    %v1520 = vpack.c.b16 %v1188, %v1187
    %v1521 = vpack.c.b16 %v1190, %v1189
    %v1522 = vpack.c.b16 %v1192, %v1191
    %v1523 = vpack.c.b16 %v1194, %v1193
    %v1524 = vpack.c.b16 %v1196, %v1195
    %v1525 = vpack.c.b16 %v1198, %v1197
    %v1526 = vpack.c.b16 %v1200, %v1199
    %v1527 = vpack.c.b16 %v1202, %v1201
    %v1528 = vpack.c.b16 %v1204, %v1203
    %v1529 = vpack.c.b16 %v1206, %v1205
    %v1530 = vpack.c.b16 %v1208, %v1207
    %v1531 = vpack.c.b16 %v1210, %v1209
    %v1532 = vpack.c.b16 %v1212, %v1211
    %v1533 = vpack.c.b16 %v1214, %v1213
    %v1534 = vpack.c.b16 %v1216, %v1215
    %v1535 = vpack.c.b16 %v1218, %v1217
    %v1536 = vpack.c.b16 %v1220, %v1219
    %v1537 = vpack.c.b16 %v1222, %v1221
    %v1538 = vpack.c.b16 %v1224, %v1223
    %v1539 = vpack.c.b16 %v1226, %v1225
    %v1540 = vpack.c.b16 %v1228, %v1227
    %v1541 = vpack.c.b16 %v1230, %v1229
    %v1542 = vpack.c.b16 %v1232, %v1231
    %v1543 = vpack.c.b16 %v1234, %v1233
    %v1544 = vpack.c.b16 %v1236, %v1235
    %v1545 = vpack.c.b16 %v1238, %v1237
    %v1546 = vpack.c.b16 %v1240, %v1239
    %v1547 = vpack.c.b16 %v1242, %v1241
    %v1548 = vpack.c.b16 %v1244, %v1243
    %v1549 = vpack.c.b16 %v1246, %v1245
    %v1550 = vpack.c.b16 %v1248, %v1247
    %v1551 = vpack.c.b16 %v1250, %v1249
    %v1552 = vpack.c.b16 %v1252, %v1251
    %v1553 = vpack.c.b16 %v1254, %v1253
    %v1554 = vpack.c.b16 %v1256, %v1255
    %v1555 = vpack.c.b16 %v1258, %v1257
    %v1556 = vpack.c.b16 %v1260, %v1259
    %v1557 = vpack.c.b16 %v1262, %v1261
    %v1558 = vpack.c.b16 %v1264, %v1263
    %v1559 = vpack.c.b16 %v1266, %v1265
    %v1560 = vpack.c.b16 %v1268, %v1267
    %v1561 = vpack.c.b16 %v1270, %v1269
    %v1562 = vpack.c.b16 %v1272, %v1271
    %v1563 = vpack.c.b16 %v1274, %v1273
    %v1564 = vpack.c.b16 %v1276, %v1275
    %v1565 = vpack.c.b16 %v1278, %v1277
    %v1566 = vpack.c.b16 %v1280, %v1279
    %v1567 = vpack.c.b16 %v1282, %v1281
    %v1568 = vpack.c.b16 %v1284, %v1283
    %v1569 = vpack.c.b16 %v1286, %v1285
    %v1570 = vpack.c.b16 %v1288, %v1287
    %v1571 = vpack.c.b16 %v1290, %v1289
    %v1572 = vpack.c.b16 %v1292, %v1291
    %v1573 = vpack.c.b16 %v1294, %v1293
    %v1574 = vpack.c.b16 %v1296, %v1295
    %v1575 = vpack.c.b16 %v1298, %v1297
    %v1576 = vpack.c.b16 %v1300, %v1299
    %v1577 = vpack.c.b16 %v1302, %v1301
    %v1578 = vpack.c.b16 %v1304, %v1303
    %v1579 = vpack.c.b16 %v1306, %v1305
    %v1580 = vpack.c.b16 %v1308, %v1307
    %v1581 = vpack.c.b16 %v1310, %v1309
    %v1582 = vpack.c.b16 %v1312, %v1311
    %v1583 = vpack.c.b16 %v1314, %v1313
    %v1584 = vpack.c.b16 %v1316, %v1315
    %v1585 = vpack.c.b16 %v1318, %v1317
    %v1586 = vpack.c.b16 %v1320, %v1319
    %v1587 = vpack.c.b16 %v1322, %v1321
    %v1588 = vpack.c.b16 %v1324, %v1323
    %v1589 = vpack.c.b16 %v1326, %v1325
    %v1590 = vpack.c.b16 %v1328, %v1327
    %v1591 = vpack.c.b16 %v1330, %v1329
    %v1592 = vpack.c.b16 %v1332, %v1331
    %v1593 = vpack.c.b16 %v1334, %v1333
    %v1594 = vpack.c.b16 %v1336, %v1335
    %v1595 = vpack.c.b16 %v1338, %v1337
    %v1596 = vpack.c.b16 %v1340, %v1339
    %v1597 = vpack.c.b16 %v1342, %v1341
    %v1598 = vpack.c.b16 %v1344, %v1343
    %v1599 = vpack.c.b16 %v1346, %v1345
    %v1600 = vpack.c.b16 %v1348, %v1347
    %v1601 = vpack.c.b16 %v1350, %v1349
    %v1602 = vpack.c.b16 %v1352, %v1351
    %v1603 = vpack.c.b16 %v1354, %v1353
    %v1604 = vpack.c.b16 %v1356, %v1355
    %v1605 = vpack.c.b16 %v1358, %v1357
    %v1606 = vpack.c.b16 %v1360, %v1359
    %v1607 = vpack.c.b16 %v1362, %v1361
    %v1608 = vpack.c.b16 %v1364, %v1363
    %v1609 = vpack.c.b16 %v1366, %v1365
    %v1610 = vpack.c.b16 %v1368, %v1367
    %v1611 = vpack.c.b16 %v1370, %v1369
    %v1612 = vpack.c.b16 %v1372, %v1371
    %v1613 = vpack.c.b16 %v1374, %v1373
    %v1614 = vpack.c.b16 %v1376, %v1375
    %v1615 = vpack.c.b16 %v1378, %v1377
    %v1616 = vpack.c.b16 %v1380, %v1379
    %v1617 = vpack.c.b16 %v1382, %v1381
    %v1618 = vpack.c.b16 %v1384, %v1383
    %v1619 = vpack.c.b16 %v1386, %v1385
    %v1620 = vpack.c.b16 %v1388, %v1387
    %v1621 = vpack.c.b16 %v1390, %v1389
    %v1622 = vpack.c.b16 %v1392, %v1391
    %v1623 = vpack.c.b16 %v1394, %v1393
    %v1624 = vpack.c.b16 %v1396, %v1395
    %v1625 = vpack.c.b16 %v1398, %v1397
    %v1626 = vpack.c.b16 %v1400, %v1399
    %v1627 = vpack.c.b16 %v1402, %v1401
    %v1628 = vpack.c.b16 %v1404, %v1403
    %v1629 = vpack.c.b16 %v1406, %v1405
    %v1630 = vpack.c.b16 %v1408, %v1407
    %v1631 = vpack.c.b16 %v1410, %v1409
    %v1632 = vpack.c.b16 %v1412, %v1411
    %v1633 = vpack.c.b16 %v1414, %v1413
    %v1634 = vpack.c.b16 %v1416, %v1415
    %v1635 = vpack.c.b16 %v1418, %v1417
    %v1636 = vpack.c.b16 %v1420, %v1419
    %v1637 = vpack.c.b16 %v1422, %v1421
    %v1638 = vpack.c.b16 %v1424, %v1423
    %v1639 = vpack.c.b16 %v1426, %v1425
    %v1640 = vpack.c.b16 %v1428, %v1427
    %v1641 = vpack.c.b16 %v1430, %v1429
    %v1642 = vpack.c.b16 %v1432, %v1431
    %v1643 = vpack.c.b16 %v1434, %v1433
    %v1644 = vpack.c.b16 %v1436, %v1435
    %v1645 = vpack.c.b16 %v1438, %v1437
    %v1646 = vpack.c.b16 %v1440, %v1439
    %v1647 = vpack.c.b16 %v1442, %v1441
    %v1648 = vpack.c.b16 %v1444, %v1443
    %v1649 = vpack.c.b16 %v1446, %v1445
    %v1650 = vpack.c.b16 %v1448, %v1447
    %v1651 = vpack.c.b16 %v1450, %v1449
    %v1652 = vpack.c.b16 %v1452, %v1451
    %v1653 = vpack.c.b16 %v1454, %v1453
    %v1654 = vpack.c.b16 %v1456, %v1455
    %v1655 = vpack.c.b16 %v1458, %v1457
    %v1656 = vpack.c.b16 %v1460, %v1459
    %v1657 = vpack.c.b16 %v1462, %v1461
    %v1658 = vpack.c.b16 %v1464, %v1463
    %v1659 = vpack.c.b16 %v1466, %v1465
    %v1660 = vpack.c.b16 %v1468, %v1467
    %1853 = vmatpush.bf16.msra.mxu0 %v1476
    %1854 = vmatpush.bf16.msra.mxu0 %v1475
    %1855 = vmatpush.bf16.msra.mxu0 %v1474
    %1856 = vmatpush.bf16.msra.mxu0 %v1473
    %1857 = vmatpush.bf16.msra.mxu0 %v1472
    %1858 = vmatpush.bf16.msra.mxu0 %v1471
    %1859 = vmatpush.bf16.msra.mxu0 %v1470
    %1860 = vmatpush.bf16.msra.mxu0 %v1469
    %1861 = vmatmul.bf16.gmra.mxu0 %v289
    %v1862 = vpop.f32.mrf.mxu0
    %v1863 = vadd.f32 %v699, %v1862
    %v1864 = vpop.f32.mrf.mxu0
    %v1865 = vadd.f32 %v699, %v1864
    %1866 = vdwg.mxu0
    %1867 = vmatpush.bf16.msra.mxu0 %v1484
    %1868 = vmatpush.bf16.msra.mxu0 %v1483
    %1869 = vmatpush.bf16.msra.mxu0 %v1482
    %1870 = vmatpush.bf16.msra.mxu0 %v1481
    %1871 = vmatpush.bf16.msra.mxu0 %v1480
    %1872 = vmatpush.bf16.msra.mxu0 %v1479
    %1873 = vmatpush.bf16.msra.mxu0 %v1478
    %1874 = vmatpush.bf16.msra.mxu0 %v1477
    %1875 = vmatmul.bf16.gmra.mxu0 %v290
    %v1876 = vpop.f32.mrf.mxu0
    %v1877 = vadd.f32 %v1863, %v1876
    %v1878 = vpop.f32.mrf.mxu0
    %v1879 = vadd.f32 %v1865, %v1878
    %1880 = vdwg.mxu0
    %1881 = vmatpush.bf16.msra.mxu0 %v1492
    %1882 = vmatpush.bf16.msra.mxu0 %v1491
    %1883 = vmatpush.bf16.msra.mxu0 %v1490
    %1884 = vmatpush.bf16.msra.mxu0 %v1489
    %1885 = vmatpush.bf16.msra.mxu0 %v1488
    %1886 = vmatpush.bf16.msra.mxu0 %v1487
    %1887 = vmatpush.bf16.msra.mxu0 %v1486
    %1888 = vmatpush.bf16.msra.mxu0 %v1485
    %1889 = vmatmul.bf16.gmra.mxu0 %v291
    %v1890 = vpop.f32.mrf.mxu0
    %v1891 = vadd.f32 %v1877, %v1890
    %v1892 = vpop.f32.mrf.mxu0
    %v1893 = vadd.f32 %v1879, %v1892
    %1894 = vdwg.mxu0
    %1895 = vmatpush.bf16.msra.mxu0 %v1500
    %1896 = vmatpush.bf16.msra.mxu0 %v1499
    %1897 = vmatpush.bf16.msra.mxu0 %v1498
    %1898 = vmatpush.bf16.msra.mxu0 %v1497
    %1899 = vmatpush.bf16.msra.mxu0 %v1496
    %1900 = vmatpush.bf16.msra.mxu0 %v1495
    %1901 = vmatpush.bf16.msra.mxu0 %v1494
    %1902 = vmatpush.bf16.msra.mxu0 %v1493
    %1903 = vmatmul.bf16.gmra.mxu0 %v292
    %v1904 = vpop.f32.mrf.mxu0
    %v1905 = vadd.f32 %v1891, %v1904
    %v1906 = vpop.f32.mrf.mxu0
    %v1907 = vadd.f32 %v1893, %v1906
    %1908 = vdwg.mxu0
    %1909 = vmatpush.bf16.msra.mxu0 %v1508
    %1910 = vmatpush.bf16.msra.mxu0 %v1507
    %1911 = vmatpush.bf16.msra.mxu0 %v1506
    %1912 = vmatpush.bf16.msra.mxu0 %v1505
    %1913 = vmatpush.bf16.msra.mxu0 %v1504
    %1914 = vmatpush.bf16.msra.mxu0 %v1503
    %1915 = vmatpush.bf16.msra.mxu0 %v1502
    %1916 = vmatpush.bf16.msra.mxu0 %v1501
    %1917 = vmatmul.bf16.gmra.mxu0 %v293
    %v1918 = vpop.f32.mrf.mxu0
    %v1919 = vadd.f32 %v1905, %v1918
    %v1920 = vpop.f32.mrf.mxu0
    %v1921 = vadd.f32 %v1907, %v1920
    %1922 = vdwg.mxu0
    %1923 = vmatpush.bf16.msra.mxu0 %v1516
    %1924 = vmatpush.bf16.msra.mxu0 %v1515
    %1925 = vmatpush.bf16.msra.mxu0 %v1514
    %1926 = vmatpush.bf16.msra.mxu0 %v1513
    %1927 = vmatpush.bf16.msra.mxu0 %v1512
    %1928 = vmatpush.bf16.msra.mxu0 %v1511
    %1929 = vmatpush.bf16.msra.mxu0 %v1510
    %1930 = vmatpush.bf16.msra.mxu0 %v1509
    %1931 = vmatmul.bf16.gmra.mxu0 %v294
    %v1932 = vpop.f32.mrf.mxu0
    %v1933 = vadd.f32 %v1919, %v1932
    %v1934 = vpop.f32.mrf.mxu0
    %v1935 = vadd.f32 %v1921, %v1934
    %1936 = vdwg.mxu0
    %1937 = vmatpush.bf16.msra.mxu0 %v1524
    %1938 = vmatpush.bf16.msra.mxu0 %v1523
    %1939 = vmatpush.bf16.msra.mxu0 %v1522
    %1940 = vmatpush.bf16.msra.mxu0 %v1521
    %1941 = vmatpush.bf16.msra.mxu0 %v1520
    %1942 = vmatpush.bf16.msra.mxu0 %v1519
    %1943 = vmatpush.bf16.msra.mxu0 %v1518
    %1944 = vmatpush.bf16.msra.mxu0 %v1517
    %1945 = vmatmul.bf16.gmra.mxu0 %v295
    %v1946 = vpop.f32.mrf.mxu0
    %v1947 = vadd.f32 %v1933, %v1946
    %v1948 = vpop.f32.mrf.mxu0
    %v1949 = vadd.f32 %v1935, %v1948
    %1950 = vdwg.mxu0
    %1951 = vmatpush.bf16.msra.mxu0 %v1532
    %1952 = vmatpush.bf16.msra.mxu0 %v1531
    %1953 = vmatpush.bf16.msra.mxu0 %v1530
    %1954 = vmatpush.bf16.msra.mxu0 %v1529
    %1955 = vmatpush.bf16.msra.mxu0 %v1528
    %1956 = vmatpush.bf16.msra.mxu0 %v1527
    %1957 = vmatpush.bf16.msra.mxu0 %v1526
    %1958 = vmatpush.bf16.msra.mxu0 %v1525
    %1959 = vmatmul.bf16.gmra.mxu0 %v296
    %v1960 = vpop.f32.mrf.mxu0
    %v1961 = vadd.f32 %v1947, %v1960
    %v1962 = vpop.f32.mrf.mxu0
    %v1963 = vadd.f32 %v1949, %v1962
    %1964 = vdwg.mxu0
    %1965 = vmatpush.bf16.msra.mxu0 %v1540
    %1966 = vmatpush.bf16.msra.mxu0 %v1539
    %1967 = vmatpush.bf16.msra.mxu0 %v1538
    %1968 = vmatpush.bf16.msra.mxu0 %v1537
    %1969 = vmatpush.bf16.msra.mxu0 %v1536
    %1970 = vmatpush.bf16.msra.mxu0 %v1535
    %1971 = vmatpush.bf16.msra.mxu0 %v1534
    %1972 = vmatpush.bf16.msra.mxu0 %v1533
    %1973 = vmatmul.bf16.gmra.mxu0 %v297
    %v1974 = vpop.f32.mrf.mxu0
    %v1975 = vadd.f32 %v1961, %v1974
    %v1976 = vpop.f32.mrf.mxu0
    %v1977 = vadd.f32 %v1963, %v1976
    %1978 = vdwg.mxu0
    %1979 = vmatpush.bf16.msra.mxu0 %v1548
    %1980 = vmatpush.bf16.msra.mxu0 %v1547
    %1981 = vmatpush.bf16.msra.mxu0 %v1546
    %1982 = vmatpush.bf16.msra.mxu0 %v1545
    %1983 = vmatpush.bf16.msra.mxu0 %v1544
    %1984 = vmatpush.bf16.msra.mxu0 %v1543
    %1985 = vmatpush.bf16.msra.mxu0 %v1542
    %1986 = vmatpush.bf16.msra.mxu0 %v1541
    %1987 = vmatmul.bf16.gmra.mxu0 %v298
    %v1988 = vpop.f32.mrf.mxu0
    %v1989 = vadd.f32 %v1975, %v1988
    %v1990 = vpop.f32.mrf.mxu0
    %v1991 = vadd.f32 %v1977, %v1990
    %1992 = vdwg.mxu0
    %1993 = vmatpush.bf16.msra.mxu0 %v1556
    %1994 = vmatpush.bf16.msra.mxu0 %v1555
    %1995 = vmatpush.bf16.msra.mxu0 %v1554
    %1996 = vmatpush.bf16.msra.mxu0 %v1553
    %1997 = vmatpush.bf16.msra.mxu0 %v1552
    %1998 = vmatpush.bf16.msra.mxu0 %v1551
    %1999 = vmatpush.bf16.msra.mxu0 %v1550
    %2000 = vmatpush.bf16.msra.mxu0 %v1549
    %2001 = vmatmul.bf16.gmra.mxu0 %v299
    %v2002 = vpop.f32.mrf.mxu0
    %v2003 = vadd.f32 %v1989, %v2002
    %v2004 = vpop.f32.mrf.mxu0
    %v2005 = vadd.f32 %v1991, %v2004
    %2006 = vdwg.mxu0
    %2007 = vmatpush.bf16.msra.mxu0 %v1564
    %2008 = vmatpush.bf16.msra.mxu0 %v1563
    %2009 = vmatpush.bf16.msra.mxu0 %v1562
    %2010 = vmatpush.bf16.msra.mxu0 %v1561
    %2011 = vmatpush.bf16.msra.mxu0 %v1560
    %2012 = vmatpush.bf16.msra.mxu0 %v1559
    %2013 = vmatpush.bf16.msra.mxu0 %v1558
    %2014 = vmatpush.bf16.msra.mxu0 %v1557
    %2015 = vmatmul.bf16.gmra.mxu0 %v300
    %v2016 = vpop.f32.mrf.mxu0
    %v2017 = vadd.f32 %v2003, %v2016
    %v2018 = vpop.f32.mrf.mxu0
    %v2019 = vadd.f32 %v2005, %v2018
    %2020 = vdwg.mxu0
    %2021 = vmatpush.bf16.msra.mxu0 %v1572
    %2022 = vmatpush.bf16.msra.mxu0 %v1571
    %2023 = vmatpush.bf16.msra.mxu0 %v1570
    %2024 = vmatpush.bf16.msra.mxu0 %v1569
    %2025 = vmatpush.bf16.msra.mxu0 %v1568
    %2026 = vmatpush.bf16.msra.mxu0 %v1567
    %2027 = vmatpush.bf16.msra.mxu0 %v1566
    %2028 = vmatpush.bf16.msra.mxu0 %v1565
    %2029 = vmatmul.bf16.gmra.mxu0 %v301
    %v2030 = vpop.f32.mrf.mxu0
    %v2031 = vadd.f32 %v2017, %v2030
    %v2032 = vpop.f32.mrf.mxu0
    %v2033 = vadd.f32 %v2019, %v2032
    %2034 = vdwg.mxu0
    %2035 = vmatpush.bf16.msra.mxu0 %v1580
    %2036 = vmatpush.bf16.msra.mxu0 %v1579
    %2037 = vmatpush.bf16.msra.mxu0 %v1578
    %2038 = vmatpush.bf16.msra.mxu0 %v1577
    %2039 = vmatpush.bf16.msra.mxu0 %v1576
    %2040 = vmatpush.bf16.msra.mxu0 %v1575
    %2041 = vmatpush.bf16.msra.mxu0 %v1574
    %2042 = vmatpush.bf16.msra.mxu0 %v1573
    %2043 = vmatmul.bf16.gmra.mxu0 %v302
    %v2044 = vpop.f32.mrf.mxu0
    %v2045 = vadd.f32 %v2031, %v2044
    %v2046 = vpop.f32.mrf.mxu0
    %v2047 = vadd.f32 %v2033, %v2046
    %2048 = vdwg.mxu0
    %2049 = vmatpush.bf16.msra.mxu0 %v1588
    %2050 = vmatpush.bf16.msra.mxu0 %v1587
    %2051 = vmatpush.bf16.msra.mxu0 %v1586
    %2052 = vmatpush.bf16.msra.mxu0 %v1585
    %2053 = vmatpush.bf16.msra.mxu0 %v1584
    %2054 = vmatpush.bf16.msra.mxu0 %v1583
    %2055 = vmatpush.bf16.msra.mxu0 %v1582
    %2056 = vmatpush.bf16.msra.mxu0 %v1581
    %2057 = vmatmul.bf16.gmra.mxu0 %v303
    %v2058 = vpop.f32.mrf.mxu0
    %v2059 = vadd.f32 %v2045, %v2058
    %v2060 = vpop.f32.mrf.mxu0
    %v2061 = vadd.f32 %v2047, %v2060
    %2062 = vdwg.mxu0
    %2063 = vmatpush.bf16.msra.mxu0 %v1596
    %2064 = vmatpush.bf16.msra.mxu0 %v1595
    %2065 = vmatpush.bf16.msra.mxu0 %v1594
    %2066 = vmatpush.bf16.msra.mxu0 %v1593
    %2067 = vmatpush.bf16.msra.mxu0 %v1592
    %2068 = vmatpush.bf16.msra.mxu0 %v1591
    %2069 = vmatpush.bf16.msra.mxu0 %v1590
    %2070 = vmatpush.bf16.msra.mxu0 %v1589
    %2071 = vmatmul.bf16.gmra.mxu0 %v304
    %v2072 = vpop.f32.mrf.mxu0
    %v2073 = vadd.f32 %v2059, %v2072
    %v2074 = vpop.f32.mrf.mxu0
    %v2075 = vadd.f32 %v2061, %v2074
    %2076 = vdwg.mxu0
    %2077 = vmatpush.bf16.msra.mxu0 %v1604
    %2078 = vmatpush.bf16.msra.mxu0 %v1603
    %2079 = vmatpush.bf16.msra.mxu0 %v1602
    %2080 = vmatpush.bf16.msra.mxu0 %v1601
    %2081 = vmatpush.bf16.msra.mxu0 %v1600
    %2082 = vmatpush.bf16.msra.mxu0 %v1599
    %2083 = vmatpush.bf16.msra.mxu0 %v1598
    %2084 = vmatpush.bf16.msra.mxu0 %v1597
    %2085 = vmatmul.bf16.gmra.mxu0 %v305
    %v2086 = vpop.f32.mrf.mxu0
    %v2087 = vadd.f32 %v2073, %v2086
    %v2088 = vpop.f32.mrf.mxu0
    %v2089 = vadd.f32 %v2075, %v2088
    %2090 = vdwg.mxu0
    %2091 = vmatpush.bf16.msra.mxu0 %v1612
    %2092 = vmatpush.bf16.msra.mxu0 %v1611
    %2093 = vmatpush.bf16.msra.mxu0 %v1610
    %2094 = vmatpush.bf16.msra.mxu0 %v1609
    %2095 = vmatpush.bf16.msra.mxu0 %v1608
    %2096 = vmatpush.bf16.msra.mxu0 %v1607
    %2097 = vmatpush.bf16.msra.mxu0 %v1606
    %2098 = vmatpush.bf16.msra.mxu0 %v1605
    %2099 = vmatmul.bf16.gmra.mxu0 %v306
    %v2100 = vpop.f32.mrf.mxu0
    %v2101 = vadd.f32 %v2087, %v2100
    %v2102 = vpop.f32.mrf.mxu0
    %v2103 = vadd.f32 %v2089, %v2102
    %2104 = vdwg.mxu0
    %2105 = vmatpush.bf16.msra.mxu0 %v1620
    %2106 = vmatpush.bf16.msra.mxu0 %v1619
    %2107 = vmatpush.bf16.msra.mxu0 %v1618
    %2108 = vmatpush.bf16.msra.mxu0 %v1617
    %2109 = vmatpush.bf16.msra.mxu0 %v1616
    %2110 = vmatpush.bf16.msra.mxu0 %v1615
    %2111 = vmatpush.bf16.msra.mxu0 %v1614
    %2112 = vmatpush.bf16.msra.mxu0 %v1613
    %2113 = vmatmul.bf16.gmra.mxu0 %v307
    %v2114 = vpop.f32.mrf.mxu0
    %v2115 = vadd.f32 %v2101, %v2114
    %v2116 = vpop.f32.mrf.mxu0
    %v2117 = vadd.f32 %v2103, %v2116
    %2118 = vdwg.mxu0
    %2119 = vmatpush.bf16.msra.mxu0 %v1628
    %2120 = vmatpush.bf16.msra.mxu0 %v1627
    %2121 = vmatpush.bf16.msra.mxu0 %v1626
    %2122 = vmatpush.bf16.msra.mxu0 %v1625
    %2123 = vmatpush.bf16.msra.mxu0 %v1624
    %2124 = vmatpush.bf16.msra.mxu0 %v1623
    %2125 = vmatpush.bf16.msra.mxu0 %v1622
    %2126 = vmatpush.bf16.msra.mxu0 %v1621
    %2127 = vmatmul.bf16.gmra.mxu0 %v308
    %v2128 = vpop.f32.mrf.mxu0
    %v2129 = vadd.f32 %v2115, %v2128
    %v2130 = vpop.f32.mrf.mxu0
    %v2131 = vadd.f32 %v2117, %v2130
    %2132 = vdwg.mxu0
    %2133 = vmatpush.bf16.msra.mxu0 %v1636
    %2134 = vmatpush.bf16.msra.mxu0 %v1635
    %2135 = vmatpush.bf16.msra.mxu0 %v1634
    %2136 = vmatpush.bf16.msra.mxu0 %v1633
    %2137 = vmatpush.bf16.msra.mxu0 %v1632
    %2138 = vmatpush.bf16.msra.mxu0 %v1631
    %2139 = vmatpush.bf16.msra.mxu0 %v1630
    %2140 = vmatpush.bf16.msra.mxu0 %v1629
    %2141 = vmatmul.bf16.gmra.mxu0 %v309
    %v2142 = vpop.f32.mrf.mxu0
    %v2143 = vadd.f32 %v2129, %v2142
    %v2144 = vpop.f32.mrf.mxu0
    %v2145 = vadd.f32 %v2131, %v2144
    %2146 = vdwg.mxu0
    %2147 = vmatpush.bf16.msra.mxu0 %v1644
    %2148 = vmatpush.bf16.msra.mxu0 %v1643
    %2149 = vmatpush.bf16.msra.mxu0 %v1642
    %2150 = vmatpush.bf16.msra.mxu0 %v1641
    %2151 = vmatpush.bf16.msra.mxu0 %v1640
    %2152 = vmatpush.bf16.msra.mxu0 %v1639
    %2153 = vmatpush.bf16.msra.mxu0 %v1638
    %2154 = vmatpush.bf16.msra.mxu0 %v1637
    %2155 = vmatmul.bf16.gmra.mxu0 %v310
    %v2156 = vpop.f32.mrf.mxu0
    %v2157 = vadd.f32 %v2143, %v2156
    %v2158 = vpop.f32.mrf.mxu0
    %v2159 = vadd.f32 %v2145, %v2158
    %2160 = vdwg.mxu0
    %2161 = vmatpush.bf16.msra.mxu0 %v1652
    %2162 = vmatpush.bf16.msra.mxu0 %v1651
    %2163 = vmatpush.bf16.msra.mxu0 %v1650
    %2164 = vmatpush.bf16.msra.mxu0 %v1649
    %2165 = vmatpush.bf16.msra.mxu0 %v1648
    %2166 = vmatpush.bf16.msra.mxu0 %v1647
    %2167 = vmatpush.bf16.msra.mxu0 %v1646
    %2168 = vmatpush.bf16.msra.mxu0 %v1645
    %2169 = vmatmul.bf16.gmra.mxu0 %v311
    %v2170 = vpop.f32.mrf.mxu0
    %v2171 = vadd.f32 %v2157, %v2170
    %v2172 = vpop.f32.mrf.mxu0
    %v2173 = vadd.f32 %v2159, %v2172
    %2174 = vdwg.mxu0
    %2175 = vmatpush.bf16.msra.mxu0 %v1660
    %2176 = vmatpush.bf16.msra.mxu0 %v1659
    %2177 = vmatpush.bf16.msra.mxu0 %v1658
    %2178 = vmatpush.bf16.msra.mxu0 %v1657
    %2179 = vmatpush.bf16.msra.mxu0 %v1656
    %2180 = vmatpush.bf16.msra.mxu0 %v1655
    %2181 = vmatpush.bf16.msra.mxu0 %v1654
    %2182 = vmatpush.bf16.msra.mxu0 %v1653
    %2183 = vmatmul.bf16.gmra.mxu0 %v312
    %v2184 = vpop.f32.mrf.mxu0
    %v2185 = vadd.f32 %v2171, %v2184
    %v2186 = vpop.f32.mrf.mxu0
    %v2187 = vadd.f32 %v2173, %v2186
    %2188 = vdwg.mxu0
    %v2189 = vmax.f32 %v2185, 0.0
    %v2190 = vmax.f32 %v2187, 0.0
    %v2191 = vpack.c.bf16 %v2190, %v2189
    %v2192 = vld [vmem:[%s3] sm:$0xf]
    %v2193 = vld [vmem:[%s3 + $0x4] sm:$0xf]
    %v2194 = vld [vmem:[%s3 + $0x8] sm:$0xf]
    %v2195 = vld [vmem:[%s3 + $0xc] sm:$0xf]
    %v2196 = vld [vmem:[%s3 + $0x10] sm:$0xf]
    %v2197 = vld [vmem:[%s3 + $0x14] sm:$0xf]
    %v2198 = vld [vmem:[%s3 + $0x18] sm:$0xf]
    %v2199 = vld [vmem:[%s3 + $0x1c] sm:$0xf]
    %v2200 = vld [vmem:[%s3 + $0x20] sm:$0xf]
    %v2201 = vld [vmem:[%s3 + $0x24] sm:$0xf]
    %v2202 = vld [vmem:[%s3 + $0x28] sm:$0xf]
    %v2203 = vld [vmem:[%s3 + $0x2c] sm:$0xf]
    %v2204 = vld [vmem:[%s3 + $0x30] sm:$0xf]
    %v2205 = vld [vmem:[%s3 + $0x34] sm:$0xf]
    %v2206 = vld [vmem:[%s3 + $0x38] sm:$0xf]
    %v2207 = vld [vmem:[%s3 + $0x3c] sm:$0xf]
    %v2208 = vld [vmem:[%s4] sm:$0x1]
    %v2210 = vperm.slane %v2208, 0
    %v2228 = vunpack.c.l.b16 %v2192
    %v2229 = vunpack.c.l.b16 %v2193
    %v2230 = vunpack.c.l.b16 %v2194
    %v2231 = vunpack.c.l.b16 %v2195
    %v2232 = vunpack.c.l.b16 %v2196
    %v2233 = vunpack.c.l.b16 %v2197
    %v2234 = vunpack.c.l.b16 %v2198
    %v2235 = vunpack.c.l.b16 %v2199
    %v2236 = vunpack.c.l.b16 %v2200
    %v2237 = vunpack.c.l.b16 %v2201
    %v2238 = vunpack.c.l.b16 %v2202
    %v2239 = vunpack.c.l.b16 %v2203
    %v2240 = vunpack.c.l.b16 %v2204
    %v2241 = vunpack.c.l.b16 %v2205
    %v2242 = vunpack.c.l.b16 %v2206
    %v2243 = vunpack.c.l.b16 %v2207
    %v2244 = vpack.c.b16 %v2229, %v2228
    %v2245 = vpack.c.b16 %v2231, %v2230
    %v2246 = vpack.c.b16 %v2233, %v2232
    %v2247 = vpack.c.b16 %v2235, %v2234
    %v2248 = vpack.c.b16 %v2237, %v2236
    %v2249 = vpack.c.b16 %v2239, %v2238
    %v2250 = vpack.c.b16 %v2241, %v2240
    %v2251 = vpack.c.b16 %v2243, %v2242
    %2260 = vmatpush.bf16.msra.mxu0 %v2251
    %2261 = vmatpush.bf16.msra.mxu0 %v2250
    %2262 = vmatpush.bf16.msra.mxu0 %v2249
    %2263 = vmatpush.bf16.msra.mxu0 %v2248
    %2264 = vmatpush.bf16.msra.mxu0 %v2247
    %2265 = vmatpush.bf16.msra.mxu0 %v2246
    %2266 = vmatpush.bf16.msra.mxu0 %v2245
    %2267 = vmatpush.bf16.msra.mxu0 %v2244
    %2268 = vmatmul.bf16.gmra.mxu0 %v2191
    %v2269 = vpop.f32.mrf.mxu0
    %v2270 = vadd.f32 %v2210, %v2269
    %v2271 = vpop.f32.mrf.mxu0
    %v2272 = vadd.f32 %v2210, %v2271
    %2273 = vdwg.mxu0
    %v2274 = vmax.f32 %v2270, 0.0
    %v2275 = vmax.f32 %v2272, 0.0
    %v2276 = vpack.c.bf16 %v2275, %v2274
    %v2277 = vld [vmem:[%s5] sm:$0xf]
    %v2278 = vld [vmem:[%s5 + $0x4] sm:$0xf]
    %v2279 = vld [vmem:[%s5 + $0x8] sm:$0xf]
    %v2280 = vld [vmem:[%s5 + $0xc] sm:$0xf]
    %v2281 = vld [vmem:[%s5 + $0x10] sm:$0xf]
    %v2282 = vld [vmem:[%s5 + $0x14] sm:$0xf]
    %v2283 = vld [vmem:[%s5 + $0x18] sm:$0xf]
    %v2284 = vld [vmem:[%s5 + $0x1c] sm:$0xf]
    %v2285 = vld [vmem:[%s5 + $0x20] sm:$0xf]
    %v2286 = vld [vmem:[%s5 + $0x24] sm:$0xf]
    %v2287 = vld [vmem:[%s5 + $0x28] sm:$0xf]
    %v2288 = vld [vmem:[%s5 + $0x2c] sm:$0xf]
    %v2289 = vld [vmem:[%s5 + $0x30] sm:$0xf]
    %v2290 = vld [vmem:[%s5 + $0x34] sm:$0xf]
    %v2291 = vld [vmem:[%s5 + $0x38] sm:$0xf]
    %v2292 = vld [vmem:[%s5 + $0x3c] sm:$0xf]
    %v2293 = vld [vmem:[%s6] sm:$0x1]
    %v2295 = vperm.slane %v2293, 0
    %v2313 = vunpack.c.l.b16 %v2277
    %v2314 = vunpack.c.l.b16 %v2278
    %v2315 = vunpack.c.l.b16 %v2279
    %v2316 = vunpack.c.l.b16 %v2280
    %v2317 = vunpack.c.l.b16 %v2281
    %v2318 = vunpack.c.l.b16 %v2282
    %v2319 = vunpack.c.l.b16 %v2283
    %v2320 = vunpack.c.l.b16 %v2284
    %v2321 = vunpack.c.l.b16 %v2285
    %v2322 = vunpack.c.l.b16 %v2286
    %v2323 = vunpack.c.l.b16 %v2287
    %v2324 = vunpack.c.l.b16 %v2288
    %v2325 = vunpack.c.l.b16 %v2289
    %v2326 = vunpack.c.l.b16 %v2290
    %v2327 = vunpack.c.l.b16 %v2291
    %v2328 = vunpack.c.l.b16 %v2292
    %v2329 = vpack.c.b16 %v2314, %v2313
    %v2330 = vpack.c.b16 %v2316, %v2315
    %v2331 = vpack.c.b16 %v2318, %v2317
    %v2332 = vpack.c.b16 %v2320, %v2319
    %v2333 = vpack.c.b16 %v2322, %v2321
    %v2334 = vpack.c.b16 %v2324, %v2323
    %v2335 = vpack.c.b16 %v2326, %v2325
    %v2336 = vpack.c.b16 %v2328, %v2327
    %2345 = vmatpush.bf16.msra.mxu0 %v2336
    %2346 = vmatpush.bf16.msra.mxu0 %v2335
    %2347 = vmatpush.bf16.msra.mxu0 %v2334
    %2348 = vmatpush.bf16.msra.mxu0 %v2333
    %2349 = vmatpush.bf16.msra.mxu0 %v2332
    %2350 = vmatpush.bf16.msra.mxu0 %v2331
    %2351 = vmatpush.bf16.msra.mxu0 %v2330
    %2352 = vmatpush.bf16.msra.mxu0 %v2329
    %2353 = vmatmul.bf16.gmra.mxu0 %v2276
    %v2354 = vpop.f32.mrf.mxu0
    %v2355 = vadd.f32 %v2295, %v2354
    %v2356 = vpop.f32.mrf.mxu0
    %v2357 = vadd.f32 %v2295, %v2356
    %2358 = vdwg.mxu0
    %v2359 = vpack.c.bf16 %v2355, %v2355
    %v2360 = vpack.c.bf16 %v2357, %v2357
    %v2363 = vrot.slane %v2359, 3
    %v2364 = vrot.slane %v2360, 3
    %vm2365 = vcmask 1040384
    %v2368 = vsel %vm2365, %v2359, %v2363
    %vm2369 = vcmask 1041409
    %v2370 = vsel %vm2369, %v2359, %v2363
    %v2372 = vrot.slane %v2370, 1
    %vm2373 = vcmask 1042434
    %v2374 = vsel %vm2373, %v2359, %v2363
    %v2376 = vrot.slane %v2374, 2
    %vm2377 = vcmask 1043459
    %v2378 = vsel %vm2377, %v2359, %v2363
    %v2380 = vrot.slane %v2378, 3
    %v2383 = vsel %vm2365, %v2360, %v2364
    %v2384 = vsel %vm2369, %v2360, %v2364
    %v2386 = vrot.slane %v2384, 1
    %v2387 = vsel %vm2373, %v2360, %v2364
    %v2389 = vrot.slane %v2387, 2
    %v2390 = vsel %vm2377, %v2360, %v2364
    %v2392 = vrot.slane %v2390, 3
    %2401 = vst [vmem:[#allocation4] sm:$0x1] %v2368
    %2402 = vst [vmem:[#allocation4 + $0x1] sm:$0x1] %v2372
    %2403 = vst [vmem:[#allocation4 + $0x2] sm:$0x1] %v2376
    %2404 = vst [vmem:[#allocation4 + $0x3] sm:$0x1] %v2380
    %2405 = vst [vmem:[#allocation4 + $0x4] sm:$0x1] %v2383
    %2406 = vst [vmem:[#allocation4 + $0x5] sm:$0x1] %v2386
    %2407 = vst [vmem:[#allocation4 + $0x6] sm:$0x1] %v2389
    %2408 = vst [vmem:[#allocation4 + $0x7] sm:$0x1] %v2392
    // Predicated region
    $region34: #{mlp_forward.1} parent=1 // pred_check
      _
    $region35: #{mlp_forward.1} parent=1 // pred_check_branch
      %2410 = sbr.rel (0) target = $region37
    $region36: #{mlp_forward.1} parent=1 // pred_region
      // Predicated region
      $region38: #{mlp_forward.1} parent=36 // pred_check
        _
      $region39: #{mlp_forward.1} parent=36 // pred_check_branch
        %2412 = sbr.rel (0) target = $region41
      $region40: #{mlp_forward.1} parent=36 // pred_region
        // Predicated region
        $region42: #{mlp_forward.1} parent=40 // pred_check
          _
        $region43: #{mlp_forward.1} parent=40 // pred_check_branch
          %2414 = sbr.rel target = $region45
        $region44: #{mlp_forward.1} parent=40 // pred_region
          // Predicated region
          $region57: #{mlp_forward.1} parent=44 // pred_check
            _
          $region58: #{mlp_forward.1} parent=44 // pred_check_branch
            %2430 = sbr.rel (0) target = $region60
          $region59: #{mlp_forward.1} parent=44 // pred_region
            %s2432 = ssub.s32 2, 1
            loop: start=0, step=1, limit=1
            $region61: #{mlp_forward.1} parent=59 // loop_pre_header
              _
            $region62: #{mlp_forward.1} parent=59 // loop_header
              %s2434 = sphi 0, %s2438
              %p2435 = scmp.ge.s32.totalorder %s2434, 1
              %s2439 = sphi [#allocation4], [#allocation4]
              %s2440 = sphi %s7, %s7
            $region63: #{mlp_forward.1} parent=59 // loop_header_branch
              %2437 = sbr.rel (%p2435) target = $region67
            $region64: #{mlp_forward.1} parent=59 // loop_body
              %v2441 = vld [vmem:[%s2439] sm:%s2432]
              %2442 = vst [vmem:[%s2440] sm:%s2432] %v2441
            $region65: #{mlp_forward.1} parent=59 // loop_footer
              %s2438 = sadd.s32 1, %s2434
            $region66: #{mlp_forward.1} parent=59 // loop_footer_branch
              %2433 = sbr.rel target = $region62
            $region67: #{mlp_forward.1} parent=59 // loop_exit
              _
          $region60: #{mlp_forward.1} parent=44 // pred_fallthru
            _
        $region45: #{mlp_forward.1} parent=40 // pred_fallthru
          _
        // Predicated region
        $region46: #{mlp_forward.1} parent=40 // pred_check
          _
        $region47: #{mlp_forward.1} parent=40 // pred_check_branch
          %2416 = sbr.rel (0) target = $region49
        $region48: #{mlp_forward.1} parent=40 // pred_region
          %s2418 = ssub.s32 2, 1
          loop: start=0, step=1, limit=1
          $region50: #{mlp_forward.1} parent=48 // loop_pre_header
            _
          $region51: #{mlp_forward.1} parent=48 // loop_header
            %s2420 = sphi 0, %s2424
            %p2421 = scmp.ge.s32.totalorder %s2420, 1
            %s2425 = sphi [#allocation4], [#allocation4]
            %s2426 = sphi %s7, %s7
          $region52: #{mlp_forward.1} parent=48 // loop_header_branch
            %2423 = sbr.rel (%p2421) target = $region56
          $region53: #{mlp_forward.1} parent=48 // loop_body
            %v2427 = vld [vmem:[%s2425] sm:%s2418]
            %2428 = vst [vmem:[%s2426] sm:%s2418] %v2427
          $region54: #{mlp_forward.1} parent=48 // loop_footer
            %s2424 = sadd.s32 1, %s2420
          $region55: #{mlp_forward.1} parent=48 // loop_footer_branch
            %2419 = sbr.rel target = $region51
          $region56: #{mlp_forward.1} parent=48 // loop_exit
            _
        $region49: #{mlp_forward.1} parent=40 // pred_fallthru
          _
      $region41: #{mlp_forward.1} parent=36 // pred_fallthru
        _
      %2443 = vnop
    $region37: #{mlp_forward.1} parent=1 // pred_fallthru
      _
    // Predicated region
    $region68: #{mlp_forward.1} parent=1 // pred_check
      _
    $region69: #{mlp_forward.1} parent=1 // pred_check_branch
      %2445 = sbr.rel (0) target = $region71
    $region70: #{mlp_forward.1} parent=1 // pred_region
      _
    $region71: #{mlp_forward.1} parent=1 // pred_fallthru
      _
    %2446 = vsyncpa [#allocation3], 1

</llo_original>
